<compile_context>
chip_gen: v7x
topology: tpu7x:2x2x1
jax: 0.10.0
libtpu: 0.0.40
codegen_flags: <defaults>
</compile_context>

<pallas_src>
import jax
import jax.numpy as jnp
from jax.experimental import pallas as pl
from jax.experimental.pallas import tpu as pltpu


def _round_up(x, m):
    return ((x + m - 1) // m) * m


def recdqn_kernel(len_ref, x_ref, wih_ref, bih_ref, whh_ref, bhh_ref,
                  w1_ref, b1_ref, w2_ref, b2_ref, out_ref, h_ref, gi_ref):
    c = pl.program_id(0)
    Tt, Bp, I = x_ref.shape
    Hp = whh_ref.shape[0]

    @pl.when(c == 0)
    def _init():
        h_ref[...] = jnp.zeros_like(h_ref)

    # ---- Phase 1: input projection for the whole chunk, one big matmul ----
    #   gi[(t, b), :] = x[t, b, :] @ W_ih (I, 3Hp) + b_ih          (lane-dense)
    x2d = x_ref[...].reshape(Tt * Bp, I)
    gi_ref[...] = (jnp.dot(x2d, wih_ref[...],
                           preferred_element_type=jnp.float32) + bih_ref[...])

    # ---- Phase 2: sequential GRU recurrence over the chunk ----
    # Steps remaining for each sequence at the start of this chunk (Bp, 1).
    rem = len_ref[...] - c * Tt

    def step(t, h):
        base = pl.multiple_of(t * Bp, Bp)
        gi = gi_ref[pl.ds(base, Bp), :]                       # (Bp, 3Hp)
        gh = (jnp.dot(h, whh_ref[...],
                      preferred_element_type=jnp.float32) + bhh_ref[...])
        # PyTorch GRU gate order: r, z, n ; lane-aligned 128-wide slices.
        r = jax.nn.sigmoid(gi[:, :Hp] + gh[:, :Hp])
        z = jax.nn.sigmoid(gi[:, Hp:2 * Hp] + gh[:, Hp:2 * Hp])
        n = jnp.tanh(gi[:, 2 * Hp:] + r * gh[:, 2 * Hp:])
        h_new = (1.0 - z) * n + z * h
        # Freeze hidden state once a sequence has ended (packed-seq semantics).
        return jnp.where(t < rem, h_new, h)

    h_ref[...] = jax.lax.fori_loop(0, Tt, step, h_ref[...], unroll=True)

    # ---- Phase 3: fused MLP head on the last grid step ----
    @pl.when(c == pl.num_programs(0) - 1)
    def _head():
        hid = jnp.maximum(h_ref[...], 0.0)                    # relu(last_rec)
        hid = jnp.maximum(
            jnp.dot(hid, w1_ref[...],
                    preferred_element_type=jnp.float32) + b1_ref[...], 0.0)
        out_ref[...] = (jnp.dot(hid, w2_ref[...],
                                preferred_element_type=jnp.float32)
                        + b2_ref[...])


def _pad_params(params, Hp, Ap):
    """Zero-pad + fuse logical params into lane/sublane-friendly layouts."""
    f32 = jnp.float32
    H = params["w_hh"].shape[-1]
    I = params["w_ih"].shape[1]
    A = params["w2"].shape[-1]

    def fuse_w(w, rows):            # (3, rows_logical, H) -> (rows, 3*Hp)
        out = jnp.zeros((rows, 3 * Hp), f32)
        for g in range(3):
            out = out.at[:w.shape[1], g * Hp:g * Hp + H].set(w[g])
        return out

    def fuse_b(b):                  # (3, 1, H) -> (1, 3*Hp)
        out = jnp.zeros((1, 3 * Hp), f32)
        for g in range(3):
            out = out.at[:, g * Hp:g * Hp + H].set(b[g])
        return out

    return {
        "w_ih": fuse_w(params["w_ih"], I),
        "b_ih": fuse_b(params["b_ih"]),
        "w_hh": fuse_w(params["w_hh"], Hp),
        "b_hh": fuse_b(params["b_hh"]),
        "w1": jnp.zeros((Hp, Hp), f32).at[:H, :H].set(params["w1"]),
        "b1": jnp.zeros((1, Hp), f32).at[:, :H].set(params["b1"]),
        "w2": jnp.zeros((Hp, Ap), f32).at[:H, :A].set(params["w2"]),
        "b2": jnp.zeros((1, Ap), f32).at[:, :A].set(params["b2"]),
    }


def recdqn_forward(x, lengths, params, *, time_chunk=8):
    """x: (L, B, I) f32 padded time-major batch, lengths: (B, 1) i32."""
    L, B, I = x.shape
    H = params["w_hh"].shape[-1]
    A = params["w2"].shape[-1]

    Bp = max(8, _round_up(B, 8))          # sublane multiple
    Hp = max(128, _round_up(H, 128))      # lane multiple
    Ap = max(128, _round_up(A, 128))      # lane-dense output slab
    Tt = time_chunk
    Lp = _round_up(L, Tt)
    n_chunks = Lp // Tt

    xp = jnp.zeros((Lp, Bp, I), jnp.float32).at[:L, :B, :].set(x)
    lenp = jnp.zeros((Bp, 1), jnp.int32).at[:B, :].set(lengths.astype(jnp.int32))
    p = _pad_params(params, Hp, Ap)

    full = lambda shape: pl.BlockSpec(shape, lambda c, _s=len(shape): (0,) * _s)

    out = pl.pallas_call(
        recdqn_kernel,
        out_shape=jax.ShapeDtypeStruct((Bp, Ap), jnp.float32),
        grid_spec=pltpu.PrefetchScalarGridSpec(
            num_scalar_prefetch=0,
            grid=(n_chunks,),
            in_specs=[
                full((Bp, 1)),                                   # lengths
                pl.BlockSpec((Tt, Bp, I), lambda c: (c, 0, 0)),  # x chunk
                full((I, 3 * Hp)),                               # W_ih fused
                full((1, 3 * Hp)),                               # b_ih fused
                full((Hp, 3 * Hp)),                              # W_hh fused
                full((1, 3 * Hp)),                               # b_hh fused
                full((Hp, Hp)),                                  # linear1 W (in,out)
                full((1, Hp)),                                   # linear1 b
                full((Hp, Ap)),                                  # linear2 W (in,out)
                full((1, Ap)),                                   # linear2 b
            ],
            out_specs=pl.BlockSpec((Bp, Ap), lambda c: (0, 0)),
            scratch_shapes=[
                pltpu.VMEM((Bp, Hp), jnp.float32),               # carried h
                pltpu.VMEM((Tt * Bp, 3 * Hp), jnp.float32),      # gi chunk
            ],
        ),
        compiler_params=pltpu.CompilerParams(
            dimension_semantics=("arbitrary",)),                 # time is sequential
    )(lenp, xp, p["w_ih"], p["b_ih"], p["w_hh"], p["b_hh"],
      p["w1"], p["b1"], p["w2"], p["b2"])

    return out[:B, :A]


def init_params(key, input_size, hidden_dim, num_actions):
    ks = jax.random.split(key, 8)
    stdv = 1.0 / jnp.sqrt(hidden_dim)
    u = lambda k, shape: jax.random.uniform(k, shape, jnp.float32, -stdv, stdv)
    return {
        # GRU weights stored per gate (r, z, n), pre-transposed to (in, hidden)
        "w_ih": u(ks[0], (3, input_size, hidden_dim)),
        "w_hh": u(ks[1], (3, hidden_dim, hidden_dim)),
        "b_ih": u(ks[2], (3, 1, hidden_dim)),
        "b_hh": u(ks[3], (3, 1, hidden_dim)),
        # Linear layers stored as (in, out)
        "w1": u(ks[4], (hidden_dim, hidden_dim)),
        "b1": u(ks[5], (1, hidden_dim)),
        "w2": u(ks[6], (hidden_dim, num_actions)),
        "b2": u(ks[7], (1, num_actions)),
    }


def recdqn_reference(x, lengths, params):
    """Pure-JAX reference of the same forward pass (sanity check)."""
    L, B, I = x.shape
    H = params["w_hh"].shape[-1]
    h = jnp.zeros((B, H), jnp.float32)
    for t in range(L):
        xt = x[t]
        gi = [xt @ params["w_ih"][g] + params["b_ih"][g] for g in range(3)]
        gh = [h @ params["w_hh"][g] + params["b_hh"][g] for g in range(3)]
        r = jax.nn.sigmoid(gi[0] + gh[0])
        z = jax.nn.sigmoid(gi[1] + gh[1])
        n = jnp.tanh(gi[2] + r * gh[2])
        h_new = (1.0 - z) * n + z * h
        h = jnp.where(t < lengths, h_new, h)
    hid = jnp.maximum(h, 0.0)
    hid = jnp.maximum(hid @ params["w1"] + params["b1"], 0.0)
    return hid @ params["w2"] + params["b2"]


if __name__ == "__main__":
    input_size, hidden_dim, num_actions = 8, 32, 4
    B, L_max = 4, 8

    key = jax.random.PRNGKey(0)
    k_param, k_x = jax.random.split(key)
    params = init_params(k_param, input_size, hidden_dim, num_actions)

    # Padded, time-major batch of variable-length sequences.
    x = jax.random.normal(k_x, (L_max, B, input_size), jnp.float32)
    lengths = jnp.array([[8], [5], [3], [7]], dtype=jnp.int32)   # (B, 1)

    out = recdqn_forward(x, lengths, params, time_chunk=4)       # grid = (2,)
    out = jax.block_until_ready(out)

    ref = recdqn_reference(x, lengths, params)
    assert out.shape == (B, num_actions)
    assert jnp.allclose(out, ref, atol=1e-5, rtol=1e-5)

    print("KERNEL_OK")
</pallas_src>

<mosaic_0001>
module attributes {stable_mosaic.version = 11 : i64} {
  func.func @recdqn_kernel(%arg0: i32, %arg1: memref<8x1xi32, #tpu.memory_space<vmem>>, %arg2: memref<4x8x8xf32, #tpu.memory_space<vmem>>, %arg3: memref<8x384xf32, #tpu.memory_space<vmem>>, %arg4: memref<1x384xf32, #tpu.memory_space<vmem>>, %arg5: memref<128x384xf32, #tpu.memory_space<vmem>>, %arg6: memref<1x384xf32, #tpu.memory_space<vmem>>, %arg7: memref<128x128xf32, #tpu.memory_space<vmem>>, %arg8: memref<1x128xf32, #tpu.memory_space<vmem>>, %arg9: memref<128x128xf32, #tpu.memory_space<vmem>>, %arg10: memref<1x128xf32, #tpu.memory_space<vmem>>, %arg11: memref<8x128xf32, #tpu.memory_space<vmem>>, %arg12: memref<8x128xf32, #tpu.memory_space<vmem>>, %arg13: memref<32x384xf32, #tpu.memory_space<vmem>>) attributes {dimension_semantics = [#tpu.dimension_semantics<arbitrary>], iteration_bounds = array<i64: 2>, scalar_prefetch = 0 : i64, scratch_operands = 2 : i64, tpu.core_type = #tpu.core_type<tc>, window_params = [{pipeline_mode = #tpu.pipeline_mode<synchronous>, transform_indices = @transform_0, window_bounds = array<i64: 8, 1>}, {transform_indices = @transform_1, window_bounds = array<i64: 4, 8, 8>}, {pipeline_mode = #tpu.pipeline_mode<synchronous>, transform_indices = @transform_2, window_bounds = array<i64: 8, 384>}, {pipeline_mode = #tpu.pipeline_mode<synchronous>, transform_indices = @transform_3, window_bounds = array<i64: 1, 384>}, {pipeline_mode = #tpu.pipeline_mode<synchronous>, transform_indices = @transform_4, window_bounds = array<i64: 128, 384>}, {pipeline_mode = #tpu.pipeline_mode<synchronous>, transform_indices = @transform_5, window_bounds = array<i64: 1, 384>}, {pipeline_mode = #tpu.pipeline_mode<synchronous>, transform_indices = @transform_6, window_bounds = array<i64: 128, 128>}, {pipeline_mode = #tpu.pipeline_mode<synchronous>, transform_indices = @transform_7, window_bounds = array<i64: 1, 128>}, {pipeline_mode = #tpu.pipeline_mode<synchronous>, transform_indices = @transform_8, window_bounds = array<i64: 128, 128>}, {pipeline_mode = #tpu.pipeline_mode<synchronous>, transform_indices = @transform_9, window_bounds = array<i64: 1, 128>}, {pipeline_mode = #tpu.pipeline_mode<synchronous>, transform_indices = @transform_10, window_bounds = array<i64: 8, 128>}]} {
    %c0_i32 = arith.constant 0 : i32
    %0 = arith.cmpi eq, %arg0, %c0_i32 : i32
    %1 = arith.extui %0 : i1 to i32
    %c0_i32_0 = arith.constant 0 : i32
    %2 = arith.cmpi ne, %1, %c0_i32_0 : i32
    scf.if %2 {
      %cst_58 = arith.constant 0.000000e+00 : f32
      %180 = vector.broadcast %cst_58 : f32 to vector<8x128xf32>
      %c0_59 = arith.constant 0 : index
      %c0_60 = arith.constant 0 : index
      %181 = vector.load %arg12[%c0_59, %c0_60] : memref<8x128xf32, #tpu.memory_space<vmem>>, vector<8x128xf32>
      tpu.vector_store %arg12[%c0_59, %c0_60], %180 {strides = array<i32>} : memref<8x128xf32, #tpu.memory_space<vmem>>, vector<8x128xf32>,
    } else {
    }
    %c0 = arith.constant 0 : index
    %c0_1 = arith.constant 0 : index
    %c0_2 = arith.constant 0 : index
    %3 = vector.load %arg2[%c0, %c0_1, %c0_2] : memref<4x8x8xf32, #tpu.memory_space<vmem>>, vector<4x8x8xf32>
    %4 = vector.shape_cast %3 : vector<4x8x8xf32> to vector<32x8xf32>
    %c0_3 = arith.constant 0 : index
    %c0_4 = arith.constant 0 : index
    %5 = vector.load %arg3[%c0_3, %c0_4] : memref<8x384xf32, #tpu.memory_space<vmem>>, vector<8x384xf32>
    %cst = arith.constant dense<0.000000e+00> : vector<32x384xf32>
    %6 = tpu.matmul %4, %5, %cst {dimension_numbers = #tpu.dot_dimension_numbers<[1], [0], [0], [1], [0, 0, 1, 1], [], []>} : vector<32x8xf32>, vector<8x384xf32>, vector<32x384xf32> -> vector<32x384xf32>
    %c0_5 = arith.constant 0 : index
    %c0_6 = arith.constant 0 : index
    %7 = vector.load %arg4[%c0_5, %c0_6] : memref<1x384xf32, #tpu.memory_space<vmem>>, vector<1x384xf32>
    %8 = vector.broadcast %7 : vector<1x384xf32> to vector<32x384xf32>
    %9 = arith.addf %6, %8 : vector<32x384xf32>
    %c0_7 = arith.constant 0 : index
    %c0_8 = arith.constant 0 : index
    %10 = vector.load %arg13[%c0_7, %c0_8] : memref<32x384xf32, #tpu.memory_space<vmem>>, vector<32x384xf32>
    tpu.vector_store %arg13[%c0_7, %c0_8], %9 {strides = array<i32>} : memref<32x384xf32, #tpu.memory_space<vmem>>, vector<32x384xf32>,
    %c0_9 = arith.constant 0 : index
    %c0_10 = arith.constant 0 : index
    %11 = vector.load %arg1[%c0_9, %c0_10] : memref<8x1xi32, #tpu.memory_space<vmem>>, vector<8x1xi32>
    %c4_i32 = arith.constant 4 : i32
    %12 = arith.muli %arg0, %c4_i32 : i32
    %13 = vector.broadcast %12 : i32 to vector<8x1xi32>
    %14 = arith.subi %11, %13 : vector<8x1xi32>
    %c0_11 = arith.constant 0 : index
    %c0_12 = arith.constant 0 : index
    %15 = vector.load %arg12[%c0_11, %c0_12] : memref<8x128xf32, #tpu.memory_space<vmem>>, vector<8x128xf32>
    %c0_i32_13 = arith.constant 0 : i32
    %c8_i32 = arith.constant 8 : i32
    %16 = arith.muli %c0_i32_13, %c8_i32 : i32
    %17 = tpu.assume_multiple %16, 8 : i32
    %18 = arith.index_cast %17 : i32 to index
    %c0_14 = arith.constant 0 : index
    %19 = vector.load %arg13[%18, %c0_14] : memref<32x384xf32, #tpu.memory_space<vmem>>, vector<8x384xf32>
    %c0_15 = arith.constant 0 : index
    %c0_16 = arith.constant 0 : index
    %20 = vector.load %arg5[%c0_15, %c0_16] : memref<128x384xf32, #tpu.memory_space<vmem>>, vector<128x384xf32>
    %cst_17 = arith.constant dense<0.000000e+00> : vector<8x384xf32>
    %21 = tpu.matmul %15, %20, %cst_17 {dimension_numbers = #tpu.dot_dimension_numbers<[1], [0], [0], [1], [0, 0, 1, 1], [], []>} : vector<8x128xf32>, vector<128x384xf32>, vector<8x384xf32> -> vector<8x384xf32>
    %c0_18 = arith.constant 0 : index
    %c0_19 = arith.constant 0 : index
    %22 = vector.load %arg6[%c0_18, %c0_19] : memref<1x384xf32, #tpu.memory_space<vmem>>, vector<1x384xf32>
    %23 = vector.broadcast %22 : vector<1x384xf32> to vector<8x384xf32>
    %24 = arith.addf %21, %23 : vector<8x384xf32>
    %25 = vector.extract_strided_slice %19 {offsets = [0, 0], sizes = [8, 128], strides = [1, 1]} : vector<8x384xf32> to vector<8x128xf32>
    %26 = vector.extract_strided_slice %24 {offsets = [0, 0], sizes = [8, 128], strides = [1, 1]} : vector<8x384xf32> to vector<8x128xf32>
    %27 = arith.addf %25, %26 : vector<8x128xf32>
    %28 = arith.negf %27 : vector<8x128xf32>
    %29 = math.exp %28 : vector<8x128xf32>
    %cst_20 = arith.constant 1.000000e+00 : f32
    %30 = vector.broadcast %cst_20 : f32 to vector<8x128xf32>
    %31 = arith.addf %30, %29 : vector<8x128xf32>
    %32 = arith.divf %30, %31 : vector<8x128xf32>
    %33 = vector.extract_strided_slice %19 {offsets = [0, 128], sizes = [8, 128], strides = [1, 1]} : vector<8x384xf32> to vector<8x128xf32>
    %34 = vector.extract_strided_slice %24 {offsets = [0, 128], sizes = [8, 128], strides = [1, 1]} : vector<8x384xf32> to vector<8x128xf32>
    %35 = arith.addf %33, %34 : vector<8x128xf32>
    %36 = arith.negf %35 : vector<8x128xf32>
    %37 = math.exp %36 : vector<8x128xf32>
    %cst_21 = arith.constant 1.000000e+00 : f32
    %38 = vector.broadcast %cst_21 : f32 to vector<8x128xf32>
    %39 = arith.addf %38, %37 : vector<8x128xf32>
    %40 = arith.divf %38, %39 : vector<8x128xf32>
    %41 = vector.extract_strided_slice %19 {offsets = [0, 256], sizes = [8, 128], strides = [1, 1]} : vector<8x384xf32> to vector<8x128xf32>
    %42 = vector.extract_strided_slice %24 {offsets = [0, 256], sizes = [8, 128], strides = [1, 1]} : vector<8x384xf32> to vector<8x128xf32>
    %43 = arith.mulf %32, %42 : vector<8x128xf32>
    %44 = arith.addf %41, %43 : vector<8x128xf32>
    %45 = math.tanh %44 : vector<8x128xf32>
    %cst_22 = arith.constant 1.000000e+00 : f32
    %46 = vector.broadcast %cst_22 : f32 to vector<8x128xf32>
    %47 = arith.subf %46, %40 : vector<8x128xf32>
    %48 = arith.mulf %47, %45 : vector<8x128xf32>
    %49 = arith.mulf %40, %15 : vector<8x128xf32>
    %50 = arith.addf %48, %49 : vector<8x128xf32>
    %51 = vector.broadcast %c0_i32_13 : i32 to vector<8x1xi32>
    %52 = arith.cmpi slt, %51, %14 : vector<8x1xi32>
    %53 = vector.shape_cast %52 : vector<8x1xi1> to vector<8x1xi1>
    %54 = vector.broadcast %53 : vector<8x1xi1> to vector<8x128xi1>
    %55 = arith.select %54, %50, %15 : vector<8x128xi1>, vector<8x128xf32>
    %c1_i32 = arith.constant 1 : i32
    %c8_i32_23 = arith.constant 8 : i32
    %56 = arith.muli %c1_i32, %c8_i32_23 : i32
    %57 = tpu.assume_multiple %56, 8 : i32
    %58 = arith.index_cast %57 : i32 to index
    %c0_24 = arith.constant 0 : index
    %59 = vector.load %arg13[%58, %c0_24] : memref<32x384xf32, #tpu.memory_space<vmem>>, vector<8x384xf32>
    %c0_25 = arith.constant 0 : index
    %c0_26 = arith.constant 0 : index
    %60 = vector.load %arg5[%c0_25, %c0_26] : memref<128x384xf32, #tpu.memory_space<vmem>>, vector<128x384xf32>
    %cst_27 = arith.constant dense<0.000000e+00> : vector<8x384xf32>
    %61 = tpu.matmul %55, %60, %cst_27 {dimension_numbers = #tpu.dot_dimension_numbers<[1], [0], [0], [1], [0, 0, 1, 1], [], []>} : vector<8x128xf32>, vector<128x384xf32>, vector<8x384xf32> -> vector<8x384xf32>
    %c0_28 = arith.constant 0 : index
    %c0_29 = arith.constant 0 : index
    %62 = vector.load %arg6[%c0_28, %c0_29] : memref<1x384xf32, #tpu.memory_space<vmem>>, vector<1x384xf32>
    %63 = vector.broadcast %62 : vector<1x384xf32> to vector<8x384xf32>
    %64 = arith.addf %61, %63 : vector<8x384xf32>
    %65 = vector.extract_strided_slice %59 {offsets = [0, 0], sizes = [8, 128], strides = [1, 1]} : vector<8x384xf32> to vector<8x128xf32>
    %66 = vector.extract_strided_slice %64 {offsets = [0, 0], sizes = [8, 128], strides = [1, 1]} : vector<8x384xf32> to vector<8x128xf32>
    %67 = arith.addf %65, %66 : vector<8x128xf32>
    %68 = arith.negf %67 : vector<8x128xf32>
    %69 = math.exp %68 : vector<8x128xf32>
    %cst_30 = arith.constant 1.000000e+00 : f32
    %70 = vector.broadcast %cst_30 : f32 to vector<8x128xf32>
    %71 = arith.addf %70, %69 : vector<8x128xf32>
    %72 = arith.divf %70, %71 : vector<8x128xf32>
    %73 = vector.extract_strided_slice %59 {offsets = [0, 128], sizes = [8, 128], strides = [1, 1]} : vector<8x384xf32> to vector<8x128xf32>
    %74 = vector.extract_strided_slice %64 {offsets = [0, 128], sizes = [8, 128], strides = [1, 1]} : vector<8x384xf32> to vector<8x128xf32>
    %75 = arith.addf %73, %74 : vector<8x128xf32>
    %76 = arith.negf %75 : vector<8x128xf32>
    %77 = math.exp %76 : vector<8x128xf32>
    %cst_31 = arith.constant 1.000000e+00 : f32
    %78 = vector.broadcast %cst_31 : f32 to vector<8x128xf32>
    %79 = arith.addf %78, %77 : vector<8x128xf32>
    %80 = arith.divf %78, %79 : vector<8x128xf32>
    %81 = vector.extract_strided_slice %59 {offsets = [0, 256], sizes = [8, 128], strides = [1, 1]} : vector<8x384xf32> to vector<8x128xf32>
    %82 = vector.extract_strided_slice %64 {offsets = [0, 256], sizes = [8, 128], strides = [1, 1]} : vector<8x384xf32> to vector<8x128xf32>
    %83 = arith.mulf %72, %82 : vector<8x128xf32>
    %84 = arith.addf %81, %83 : vector<8x128xf32>
    %85 = math.tanh %84 : vector<8x128xf32>
    %cst_32 = arith.constant 1.000000e+00 : f32
    %86 = vector.broadcast %cst_32 : f32 to vector<8x128xf32>
    %87 = arith.subf %86, %80 : vector<8x128xf32>
    %88 = arith.mulf %87, %85 : vector<8x128xf32>
    %89 = arith.mulf %80, %55 : vector<8x128xf32>
    %90 = arith.addf %88, %89 : vector<8x128xf32>
    %91 = vector.broadcast %c1_i32 : i32 to vector<8x1xi32>
    %92 = arith.cmpi slt, %91, %14 : vector<8x1xi32>
    %93 = vector.shape_cast %92 : vector<8x1xi1> to vector<8x1xi1>
    %94 = vector.broadcast %93 : vector<8x1xi1> to vector<8x128xi1>
    %95 = arith.select %94, %90, %55 : vector<8x128xi1>, vector<8x128xf32>
    %c2_i32 = arith.constant 2 : i32
    %c8_i32_33 = arith.constant 8 : i32
    %96 = arith.muli %c2_i32, %c8_i32_33 : i32
    %97 = tpu.assume_multiple %96, 8 : i32
    %98 = arith.index_cast %97 : i32 to index
    %c0_34 = arith.constant 0 : index
    %99 = vector.load %arg13[%98, %c0_34] : memref<32x384xf32, #tpu.memory_space<vmem>>, vector<8x384xf32>
    %c0_35 = arith.constant 0 : index
    %c0_36 = arith.constant 0 : index
    %100 = vector.load %arg5[%c0_35, %c0_36] : memref<128x384xf32, #tpu.memory_space<vmem>>, vector<128x384xf32>
    %cst_37 = arith.constant dense<0.000000e+00> : vector<8x384xf32>
    %101 = tpu.matmul %95, %100, %cst_37 {dimension_numbers = #tpu.dot_dimension_numbers<[1], [0], [0], [1], [0, 0, 1, 1], [], []>} : vector<8x128xf32>, vector<128x384xf32>, vector<8x384xf32> -> vector<8x384xf32>
    %c0_38 = arith.constant 0 : index
    %c0_39 = arith.constant 0 : index
    %102 = vector.load %arg6[%c0_38, %c0_39] : memref<1x384xf32, #tpu.memory_space<vmem>>, vector<1x384xf32>
    %103 = vector.broadcast %102 : vector<1x384xf32> to vector<8x384xf32>
    %104 = arith.addf %101, %103 : vector<8x384xf32>
    %105 = vector.extract_strided_slice %99 {offsets = [0, 0], sizes = [8, 128], strides = [1, 1]} : vector<8x384xf32> to vector<8x128xf32>
    %106 = vector.extract_strided_slice %104 {offsets = [0, 0], sizes = [8, 128], strides = [1, 1]} : vector<8x384xf32> to vector<8x128xf32>
    %107 = arith.addf %105, %106 : vector<8x128xf32>
    %108 = arith.negf %107 : vector<8x128xf32>
    %109 = math.exp %108 : vector<8x128xf32>
    %cst_40 = arith.constant 1.000000e+00 : f32
    %110 = vector.broadcast %cst_40 : f32 to vector<8x128xf32>
    %111 = arith.addf %110, %109 : vector<8x128xf32>
    %112 = arith.divf %110, %111 : vector<8x128xf32>
    %113 = vector.extract_strided_slice %99 {offsets = [0, 128], sizes = [8, 128], strides = [1, 1]} : vector<8x384xf32> to vector<8x128xf32>
    %114 = vector.extract_strided_slice %104 {offsets = [0, 128], sizes = [8, 128], strides = [1, 1]} : vector<8x384xf32> to vector<8x128xf32>
    %115 = arith.addf %113, %114 : vector<8x128xf32>
    %116 = arith.negf %115 : vector<8x128xf32>
    %117 = math.exp %116 : vector<8x128xf32>
    %cst_41 = arith.constant 1.000000e+00 : f32
    %118 = vector.broadcast %cst_41 : f32 to vector<8x128xf32>
    %119 = arith.addf %118, %117 : vector<8x128xf32>
    %120 = arith.divf %118, %119 : vector<8x128xf32>
    %121 = vector.extract_strided_slice %99 {offsets = [0, 256], sizes = [8, 128], strides = [1, 1]} : vector<8x384xf32> to vector<8x128xf32>
    %122 = vector.extract_strided_slice %104 {offsets = [0, 256], sizes = [8, 128], strides = [1, 1]} : vector<8x384xf32> to vector<8x128xf32>
    %123 = arith.mulf %112, %122 : vector<8x128xf32>
    %124 = arith.addf %121, %123 : vector<8x128xf32>
    %125 = math.tanh %124 : vector<8x128xf32>
    %cst_42 = arith.constant 1.000000e+00 : f32
    %126 = vector.broadcast %cst_42 : f32 to vector<8x128xf32>
    %127 = arith.subf %126, %120 : vector<8x128xf32>
    %128 = arith.mulf %127, %125 : vector<8x128xf32>
    %129 = arith.mulf %120, %95 : vector<8x128xf32>
    %130 = arith.addf %128, %129 : vector<8x128xf32>
    %131 = vector.broadcast %c2_i32 : i32 to vector<8x1xi32>
    %132 = arith.cmpi slt, %131, %14 : vector<8x1xi32>
    %133 = vector.shape_cast %132 : vector<8x1xi1> to vector<8x1xi1>
    %134 = vector.broadcast %133 : vector<8x1xi1> to vector<8x128xi1>
    %135 = arith.select %134, %130, %95 : vector<8x128xi1>, vector<8x128xf32>
    %c3_i32 = arith.constant 3 : i32
    %c8_i32_43 = arith.constant 8 : i32
    %136 = arith.muli %c3_i32, %c8_i32_43 : i32
    %137 = tpu.assume_multiple %136, 8 : i32
    %138 = arith.index_cast %137 : i32 to index
    %c0_44 = arith.constant 0 : index
    %139 = vector.load %arg13[%138, %c0_44] : memref<32x384xf32, #tpu.memory_space<vmem>>, vector<8x384xf32>
    %c0_45 = arith.constant 0 : index
    %c0_46 = arith.constant 0 : index
    %140 = vector.load %arg5[%c0_45, %c0_46] : memref<128x384xf32, #tpu.memory_space<vmem>>, vector<128x384xf32>
    %cst_47 = arith.constant dense<0.000000e+00> : vector<8x384xf32>
    %141 = tpu.matmul %135, %140, %cst_47 {dimension_numbers = #tpu.dot_dimension_numbers<[1], [0], [0], [1], [0, 0, 1, 1], [], []>} : vector<8x128xf32>, vector<128x384xf32>, vector<8x384xf32> -> vector<8x384xf32>
    %c0_48 = arith.constant 0 : index
    %c0_49 = arith.constant 0 : index
    %142 = vector.load %arg6[%c0_48, %c0_49] : memref<1x384xf32, #tpu.memory_space<vmem>>, vector<1x384xf32>
    %143 = vector.broadcast %142 : vector<1x384xf32> to vector<8x384xf32>
    %144 = arith.addf %141, %143 : vector<8x384xf32>
    %145 = vector.extract_strided_slice %139 {offsets = [0, 0], sizes = [8, 128], strides = [1, 1]} : vector<8x384xf32> to vector<8x128xf32>
    %146 = vector.extract_strided_slice %144 {offsets = [0, 0], sizes = [8, 128], strides = [1, 1]} : vector<8x384xf32> to vector<8x128xf32>
    %147 = arith.addf %145, %146 : vector<8x128xf32>
    %148 = arith.negf %147 : vector<8x128xf32>
    %149 = math.exp %148 : vector<8x128xf32>
    %cst_50 = arith.constant 1.000000e+00 : f32
    %150 = vector.broadcast %cst_50 : f32 to vector<8x128xf32>
    %151 = arith.addf %150, %149 : vector<8x128xf32>
    %152 = arith.divf %150, %151 : vector<8x128xf32>
    %153 = vector.extract_strided_slice %139 {offsets = [0, 128], sizes = [8, 128], strides = [1, 1]} : vector<8x384xf32> to vector<8x128xf32>
    %154 = vector.extract_strided_slice %144 {offsets = [0, 128], sizes = [8, 128], strides = [1, 1]} : vector<8x384xf32> to vector<8x128xf32>
    %155 = arith.addf %153, %154 : vector<8x128xf32>
    %156 = arith.negf %155 : vector<8x128xf32>
    %157 = math.exp %156 : vector<8x128xf32>
    %cst_51 = arith.constant 1.000000e+00 : f32
    %158 = vector.broadcast %cst_51 : f32 to vector<8x128xf32>
    %159 = arith.addf %158, %157 : vector<8x128xf32>
    %160 = arith.divf %158, %159 : vector<8x128xf32>
    %161 = vector.extract_strided_slice %139 {offsets = [0, 256], sizes = [8, 128], strides = [1, 1]} : vector<8x384xf32> to vector<8x128xf32>
    %162 = vector.extract_strided_slice %144 {offsets = [0, 256], sizes = [8, 128], strides = [1, 1]} : vector<8x384xf32> to vector<8x128xf32>
    %163 = arith.mulf %152, %162 : vector<8x128xf32>
    %164 = arith.addf %161, %163 : vector<8x128xf32>
    %165 = math.tanh %164 : vector<8x128xf32>
    %cst_52 = arith.constant 1.000000e+00 : f32
    %166 = vector.broadcast %cst_52 : f32 to vector<8x128xf32>
    %167 = arith.subf %166, %160 : vector<8x128xf32>
    %168 = arith.mulf %167, %165 : vector<8x128xf32>
    %169 = arith.mulf %160, %135 : vector<8x128xf32>
    %170 = arith.addf %168, %169 : vector<8x128xf32>
    %171 = vector.broadcast %c3_i32 : i32 to vector<8x1xi32>
    %172 = arith.cmpi slt, %171, %14 : vector<8x1xi32>
    %173 = vector.shape_cast %172 : vector<8x1xi1> to vector<8x1xi1>
    %174 = vector.broadcast %173 : vector<8x1xi1> to vector<8x128xi1>
    %175 = arith.select %174, %170, %135 : vector<8x128xi1>, vector<8x128xf32>
    %c4_i32_53 = arith.constant 4 : i32
    %c0_54 = arith.constant 0 : index
    %c0_55 = arith.constant 0 : index
    %176 = vector.load %arg12[%c0_54, %c0_55] : memref<8x128xf32, #tpu.memory_space<vmem>>, vector<8x128xf32>
    tpu.vector_store %arg12[%c0_54, %c0_55], %175 {strides = array<i32>} : memref<8x128xf32, #tpu.memory_space<vmem>>, vector<8x128xf32>,
    %c1_i32_56 = arith.constant 1 : i32
    %177 = arith.cmpi eq, %arg0, %c1_i32_56 : i32
    %178 = arith.extui %177 : i1 to i32
    %c0_i32_57 = arith.constant 0 : i32
    %179 = arith.cmpi ne, %178, %c0_i32_57 : i32
    scf.if %179 {
      %c0_58 = arith.constant 0 : index
      %c0_59 = arith.constant 0 : index
      %180 = vector.load %arg12[%c0_58, %c0_59] : memref<8x128xf32, #tpu.memory_space<vmem>>, vector<8x128xf32>
      %cst_60 = arith.constant 0.000000e+00 : f32
      %181 = vector.broadcast %cst_60 : f32 to vector<8x128xf32>
      %182 = arith.maximumf %180, %181 : vector<8x128xf32>
      %c0_61 = arith.constant 0 : index
      %c0_62 = arith.constant 0 : index
      %183 = vector.load %arg7[%c0_61, %c0_62] : memref<128x128xf32, #tpu.memory_space<vmem>>, vector<128x128xf32>
      %cst_63 = arith.constant dense<0.000000e+00> : vector<8x128xf32>
      %184 = tpu.matmul %182, %183, %cst_63 {dimension_numbers = #tpu.dot_dimension_numbers<[1], [0], [0], [1], [0, 0, 1, 1], [], []>} : vector<8x128xf32>, vector<128x128xf32>, vector<8x128xf32> -> vector<8x128xf32>
      %c0_64 = arith.constant 0 : index
      %c0_65 = arith.constant 0 : index
      %185 = vector.load %arg8[%c0_64, %c0_65] : memref<1x128xf32, #tpu.memory_space<vmem>>, vector<1x128xf32>
      %186 = vector.broadcast %185 : vector<1x128xf32> to vector<8x128xf32>
      %187 = arith.addf %184, %186 : vector<8x128xf32>
      %cst_66 = arith.constant 0.000000e+00 : f32
      %188 = vector.broadcast %cst_66 : f32 to vector<8x128xf32>
      %189 = arith.maximumf %187, %188 : vector<8x128xf32>
      %c0_67 = arith.constant 0 : index
      %c0_68 = arith.constant 0 : index
      %190 = vector.load %arg9[%c0_67, %c0_68] : memref<128x128xf32, #tpu.memory_space<vmem>>, vector<128x128xf32>
      %cst_69 = arith.constant dense<0.000000e+00> : vector<8x128xf32>
      %191 = tpu.matmul %189, %190, %cst_69 {dimension_numbers = #tpu.dot_dimension_numbers<[1], [0], [0], [1], [0, 0, 1, 1], [], []>} : vector<8x128xf32>, vector<128x128xf32>, vector<8x128xf32> -> vector<8x128xf32>
      %c0_70 = arith.constant 0 : index
      %c0_71 = arith.constant 0 : index
      %192 = vector.load %arg10[%c0_70, %c0_71] : memref<1x128xf32, #tpu.memory_space<vmem>>, vector<1x128xf32>
      %193 = vector.broadcast %192 : vector<1x128xf32> to vector<8x128xf32>
      %194 = arith.addf %191, %193 : vector<8x128xf32>
      %c0_72 = arith.constant 0 : index
      %c0_73 = arith.constant 0 : index
      %195 = vector.load %arg11[%c0_72, %c0_73] : memref<8x128xf32, #tpu.memory_space<vmem>>, vector<8x128xf32>
      tpu.vector_store %arg11[%c0_72, %c0_73], %194 {strides = array<i32>} : memref<8x128xf32, #tpu.memory_space<vmem>>, vector<8x128xf32>,
    } else {
    }
    return
  }
  func.func @transform_0(%arg0: i32) -> (i32, i32) {
    %c0_i32 = arith.constant 0 : i32
    %c0_i32_0 = arith.constant 0 : i32
    %c0_i32_1 = arith.constant 0 : i32
    return %c0_i32, %c0_i32_0 : i32, i32
  }
  func.func @transform_1(%arg0: i32) -> (i32, i32, i32) {
    %c0_i32 = arith.constant 0 : i32
    %c0_i32_0 = arith.constant 0 : i32
    %c0_i32_1 = arith.constant 0 : i32
    return %arg0, %c0_i32, %c0_i32_0 : i32, i32, i32
  }
  func.func @transform_2(%arg0: i32) -> (i32, i32) {
    %c0_i32 = arith.constant 0 : i32
    %c0_i32_0 = arith.constant 0 : i32
    %c0_i32_1 = arith.constant 0 : i32
    return %c0_i32, %c0_i32_0 : i32, i32
  }
  func.func @transform_3(%arg0: i32) -> (i32, i32) {
    %c0_i32 = arith.constant 0 : i32
    %c0_i32_0 = arith.constant 0 : i32
    %c0_i32_1 = arith.constant 0 : i32
    return %c0_i32, %c0_i32_0 : i32, i32
  }
  func.func @transform_4(%arg0: i32) -> (i32, i32) {
    %c0_i32 = arith.constant 0 : i32
    %c0_i32_0 = arith.constant 0 : i32
    %c0_i32_1 = arith.constant 0 : i32
    return %c0_i32, %c0_i32_0 : i32, i32
  }
  func.func @transform_5(%arg0: i32) -> (i32, i32) {
    %c0_i32 = arith.constant 0 : i32
    %c0_i32_0 = arith.constant 0 : i32
    %c0_i32_1 = arith.constant 0 : i32
    return %c0_i32, %c0_i32_0 : i32, i32
  }
  func.func @transform_6(%arg0: i32) -> (i32, i32) {
    %c0_i32 = arith.constant 0 : i32
    %c0_i32_0 = arith.constant 0 : i32
    %c0_i32_1 = arith.constant 0 : i32
    return %c0_i32, %c0_i32_0 : i32, i32
  }
  func.func @transform_7(%arg0: i32) -> (i32, i32) {
    %c0_i32 = arith.constant 0 : i32
    %c0_i32_0 = arith.constant 0 : i32
    %c0_i32_1 = arith.constant 0 : i32
    return %c0_i32, %c0_i32_0 : i32, i32
  }
  func.func @transform_8(%arg0: i32) -> (i32, i32) {
    %c0_i32 = arith.constant 0 : i32
    %c0_i32_0 = arith.constant 0 : i32
    %c0_i32_1 = arith.constant 0 : i32
    return %c0_i32, %c0_i32_0 : i32, i32
  }
  func.func @transform_9(%arg0: i32) -> (i32, i32) {
    %c0_i32 = arith.constant 0 : i32
    %c0_i32_0 = arith.constant 0 : i32
    %c0_i32_1 = arith.constant 0 : i32
    return %c0_i32, %c0_i32_0 : i32, i32
  }
  func.func @transform_10(%arg0: i32) -> (i32, i32) {
    %c0_i32 = arith.constant 0 : i32
    %c0_i32_0 = arith.constant 0 : i32
    %c0_i32_1 = arith.constant 0 : i32
    return %c0_i32, %c0_i32_0 : i32, i32
  }
}

</mosaic_0001>

<llo_original>
// kernel: tpu_custom_call.1
$region0: #{tpu_custom_call.1}
  #allocation0 [shape = 'u32[]', space=smem, size = 0x4, offset = 0x4, fixed_abs, tag = 'smem constant byte address 0x4 - core index']
  #allocation1 [shape = 'u32[144,128]{1,0:T(1,128)}', space=vmem, size = 0x12000, scoped, tag = 'internal scratch']
  #allocation2 [shape = 'f32[8,128]{1,0:T(8,128)}', space=vmem, size = 0x1000, scoped, tag = 'scratch operand']
  #allocation3 [shape = 'f32[32,384]{1,0:T(8,128)}', space=vmem, size = 0xc000, scoped, tag = 'scratch operand']
  %s0 = inlined_call_operand.vmem [shape: s32[8,1], index: 0, kind: input, shape index: {}]
  %s1 = inlined_call_operand.hbm [shape: f32[8,8,8], index: 1, kind: input, shape index: {}]
  %s2 = inlined_call_operand.hbm [shape: f32[8,384], index: 2, kind: input, shape index: {}]
  %s3 = inlined_call_operand.vmem [shape: f32[1,384], index: 3, kind: input, shape index: {}]
  %s4 = inlined_call_operand.hbm [shape: f32[128,384], index: 4, kind: input, shape index: {}]
  %s5 = inlined_call_operand.vmem [shape: f32[1,384], index: 5, kind: input, shape index: {}]
  %s6 = inlined_call_operand.hbm [shape: f32[128,128], index: 6, kind: input, shape index: {}]
  %s7 = inlined_call_operand.vmem [shape: f32[1,128], index: 7, kind: input, shape index: {}]
  %s8 = inlined_call_operand.hbm [shape: f32[128,128], index: 8, kind: input, shape index: {}]
  %s9 = inlined_call_operand.vmem [shape: f32[1,128], index: 9, kind: input, shape index: {}]
  %s10 = inlined_call_operand.hbm [shape: f32[8,128], index: 10, kind: output, shape index: {}]
  %s11 = sld [smem:[#allocation0]]
  $region101: #{tpu_custom_call.1} parent=0
    _
  %s13 = ssub.s32 1, %s11
  %s14 = scalar_select 0, %s13, %s11
  $region1: #{tpu_custom_call.1} parent=0
    #allocation4 [shape = 'u8[32768]{0}', space=vmem, size = 0x8000, scoped, tag = 'input window, operand 1']
    #allocation5 [shape = 's32[2]{0}', space=sflag, size = 0x8, scoped, tag = 'scoped memory for tpu_custom_call.1']
    #allocation6 [shape = 's32[2]{0}', space=sflag, size = 0x8, scoped, tag = 'scoped memory for tpu_custom_call.1']
    #allocation7 [shape = 'u8[12288]{0}', space=vmem, size = 0x3000, scoped, tag = 'input window, operand 2, single buffered']
    #allocation8 [shape = 's32[1]{0}', space=sflag, size = 0x4, scoped, tag = 'scoped memory for tpu_custom_call.1']
    #allocation9 [shape = 'u8[196608]{0}', space=vmem, size = 0x30000, scoped, tag = 'input window, operand 4, single buffered']
    #allocation10 [shape = 'u8[65536]{0}', space=vmem, size = 0x10000, scoped, tag = 'input window, operand 6, single buffered']
    #allocation11 [shape = 's32[1]{0}', space=sflag, size = 0x4, scoped, tag = 'scoped memory for tpu_custom_call.1']
    #allocation12 [shape = 'u8[65536]{0}', space=vmem, size = 0x10000, scoped, tag = 'input window, operand 8, single buffered']
    #allocation13 [shape = 'u8[4096]{0}', space=vmem, size = 0x1000, scoped, tag = 'output window, operand 0, single buffered']
    %15 = vsyncpa [#allocation5], 0
    %s16 = scalar_lea.sflag [#allocation5], 1
    %17 = vsyncpa %s16, 0
    %18 = vsyncpa [#allocation8], 0
    %19 = vsyncpa [#allocation11], 0
    %20 = vsyncpa [#allocation6], 0
    loop: start=0, step=1, limit=4
    $region2: #{tpu_custom_call.1} parent=1 // loop_pre_header
      _
    $region3: #{tpu_custom_call.1} parent=1 // loop_header
      %s22 = sphi 0, %s26
      %p23 = scmp.ge.s32.totalorder %s22, 4
      %s30 = sphi 0, %s30
      %s32 = sphi 0, %s30
      %s33 = sphi 0, %s32
      %s47 = sphi 0, %s33
      %s53 = sphi 0, %s55
      %s56 = sphi 0, %s53
      %s57 = sphi 0, %s56
      %s73 = sphi 0, %s57
      %s77 = sphi 0, %s77
      %s79 = sphi 0, %s77
      %s80 = sphi 0, %s79
      %s94 = sphi 0, %s80
      %s98 = sphi 0, %s98
      %s100 = sphi 0, %s98
      %s101 = sphi 0, %s100
      %s115 = sphi 0, %s101
      %s119 = sphi 0, %s119
      %s121 = sphi 0, %s119
      %s122 = sphi 0, %s121
      %s136 = sphi 0, %s122
      %s140 = sphi 0, %s140
      %s142 = sphi 0, %s140
      %s143 = sphi 0, %s142
      %s157 = sphi 0, %s143
      %s161 = sphi 0, %s161
      %s163 = sphi 0, %s161
      %s164 = sphi 0, %s163
      %s178 = sphi 0, %s164
      %s182 = sphi 0, %s182
      %s184 = sphi 0, %s182
      %s185 = sphi 0, %s184
      %s199 = sphi 0, %s185
      %s203 = sphi 0, %s203
      %s205 = sphi 0, %s203
      %s206 = sphi 0, %s205
      %s220 = sphi 0, %s206
      %s224 = sphi 0, %s224
      %s226 = sphi 0, %s224
      %s227 = sphi 0, %s226
      %s241 = sphi 0, %s227
      %s245 = sphi 0, %s245
      %s247 = sphi 0, %s245
      %s248 = sphi 0, %s247
      %s262 = sphi 0, %s248
    $region4: #{tpu_custom_call.1} parent=1 // loop_header_branch
      %25 = sbr.rel (%p23) target = $region8
    $region5: #{tpu_custom_call.1} parent=1 // loop_body
      %s27 = ssub.s32 %s22, 1
      %s28 = ssub.s32 %s22, 2
      %s29 = sadd.s32 %s22, 1
      %s31 = sadd.s32 %s30, 1
      %p34 = scmp.eq.s32.totalorder %s22, 1
      %p35 = scmp.ne.s32.totalorder %s30, %s32
      %p36 = scmp.eq.s32.totalorder %s22, 0
      %p37 = por %p35, %p36
      %p38 = scmp.ne.s32.totalorder %s30, %s32
      %p39 = scmp.eq.s32.totalorder %s27, 1
      %p40 = por %p38, %p39
      %p41 = scmp.ne.s32.totalorder %s32, %s33
      %p42 = scmp.eq.s32.totalorder %s27, 0
      %p43 = por %p41, %p42
      %p44 = scmp.ne.s32.totalorder %s32, %s33
      %p45 = scmp.eq.s32.totalorder %s28, 1
      %p46 = por %p44, %p45
      %p48 = scmp.ne.s32.totalorder %s33, %s47
      %p49 = scmp.eq.s32.totalorder %s28, 0
      %p50 = por %p48, %p49
      %s51 = ssub.s32 %s22, %s29
      %p52 = scmp.eq.s32.totalorder %s51, 0
      %s54 = sadd.s32 %s53, 1
      %s55 = scalar_select %p52, %s53, %s54
      %p58 = pneg %p52
      %p59 = scmp.eq.s32.totalorder %s22, 1
      %p60 = por %p58, %p59
      %p61 = scmp.ne.s32.totalorder %s53, %s56
      %p62 = scmp.eq.s32.totalorder %s22, 0
      %p63 = por %p61, %p62
      %p64 = scmp.ne.s32.totalorder %s53, %s56
      %p65 = scmp.eq.s32.totalorder %s27, 1
      %p66 = por %p64, %p65
      %p67 = scmp.ne.s32.totalorder %s56, %s57
      %p68 = scmp.eq.s32.totalorder %s27, 0
      %p69 = por %p67, %p68
      %p70 = scmp.ne.s32.totalorder %s56, %s57
      %p71 = scmp.eq.s32.totalorder %s28, 1
      %p72 = por %p70, %p71
      %p74 = scmp.ne.s32.totalorder %s57, %s73
      %p75 = scmp.eq.s32.totalorder %s28, 0
      %p76 = por %p74, %p75
      %s78 = sadd.s32 %s77, 1
      %p81 = scmp.eq.s32.totalorder %s22, 1
      %p82 = scmp.ne.s32.totalorder %s77, %s79
      %p83 = scmp.eq.s32.totalorder %s22, 0
      %p84 = por %p82, %p83
      %p85 = scmp.ne.s32.totalorder %s77, %s79
      %p86 = scmp.eq.s32.totalorder %s27, 1
      %p87 = por %p85, %p86
      %p88 = scmp.ne.s32.totalorder %s79, %s80
      %p89 = scmp.eq.s32.totalorder %s27, 0
      %p90 = por %p88, %p89
      %p91 = scmp.ne.s32.totalorder %s79, %s80
      %p92 = scmp.eq.s32.totalorder %s28, 1
      %p93 = por %p91, %p92
      %p95 = scmp.ne.s32.totalorder %s80, %s94
      %p96 = scmp.eq.s32.totalorder %s28, 0
      %p97 = por %p95, %p96
      %s99 = sadd.s32 %s98, 1
      %p102 = scmp.eq.s32.totalorder %s22, 1
      %p103 = scmp.ne.s32.totalorder %s98, %s100
      %p104 = scmp.eq.s32.totalorder %s22, 0
      %p105 = por %p103, %p104
      %p106 = scmp.ne.s32.totalorder %s98, %s100
      %p107 = scmp.eq.s32.totalorder %s27, 1
      %p108 = por %p106, %p107
      %p109 = scmp.ne.s32.totalorder %s100, %s101
      %p110 = scmp.eq.s32.totalorder %s27, 0
      %p111 = por %p109, %p110
      %p112 = scmp.ne.s32.totalorder %s100, %s101
      %p113 = scmp.eq.s32.totalorder %s28, 1
      %p114 = por %p112, %p113
      %p116 = scmp.ne.s32.totalorder %s101, %s115
      %p117 = scmp.eq.s32.totalorder %s28, 0
      %p118 = por %p116, %p117
      %s120 = sadd.s32 %s119, 1
      %p123 = scmp.eq.s32.totalorder %s22, 1
      %p124 = scmp.ne.s32.totalorder %s119, %s121
      %p125 = scmp.eq.s32.totalorder %s22, 0
      %p126 = por %p124, %p125
      %p127 = scmp.ne.s32.totalorder %s119, %s121
      %p128 = scmp.eq.s32.totalorder %s27, 1
      %p129 = por %p127, %p128
      %p130 = scmp.ne.s32.totalorder %s121, %s122
      %p131 = scmp.eq.s32.totalorder %s27, 0
      %p132 = por %p130, %p131
      %p133 = scmp.ne.s32.totalorder %s121, %s122
      %p134 = scmp.eq.s32.totalorder %s28, 1
      %p135 = por %p133, %p134
      %p137 = scmp.ne.s32.totalorder %s122, %s136
      %p138 = scmp.eq.s32.totalorder %s28, 0
      %p139 = por %p137, %p138
      %s141 = sadd.s32 %s140, 1
      %p144 = scmp.eq.s32.totalorder %s22, 1
      %p145 = scmp.ne.s32.totalorder %s140, %s142
      %p146 = scmp.eq.s32.totalorder %s22, 0
      %p147 = por %p145, %p146
      %p148 = scmp.ne.s32.totalorder %s140, %s142
      %p149 = scmp.eq.s32.totalorder %s27, 1
      %p150 = por %p148, %p149
      %p151 = scmp.ne.s32.totalorder %s142, %s143
      %p152 = scmp.eq.s32.totalorder %s27, 0
      %p153 = por %p151, %p152
      %p154 = scmp.ne.s32.totalorder %s142, %s143
      %p155 = scmp.eq.s32.totalorder %s28, 1
      %p156 = por %p154, %p155
      %p158 = scmp.ne.s32.totalorder %s143, %s157
      %p159 = scmp.eq.s32.totalorder %s28, 0
      %p160 = por %p158, %p159
      %s162 = sadd.s32 %s161, 1
      %p165 = scmp.eq.s32.totalorder %s22, 1
      %p166 = scmp.ne.s32.totalorder %s161, %s163
      %p167 = scmp.eq.s32.totalorder %s22, 0
      %p168 = por %p166, %p167
      %p169 = scmp.ne.s32.totalorder %s161, %s163
      %p170 = scmp.eq.s32.totalorder %s27, 1
      %p171 = por %p169, %p170
      %p172 = scmp.ne.s32.totalorder %s163, %s164
      %p173 = scmp.eq.s32.totalorder %s27, 0
      %p174 = por %p172, %p173
      %p175 = scmp.ne.s32.totalorder %s163, %s164
      %p176 = scmp.eq.s32.totalorder %s28, 1
      %p177 = por %p175, %p176
      %p179 = scmp.ne.s32.totalorder %s164, %s178
      %p180 = scmp.eq.s32.totalorder %s28, 0
      %p181 = por %p179, %p180
      %s183 = sadd.s32 %s182, 1
      %p186 = scmp.eq.s32.totalorder %s22, 1
      %p187 = scmp.ne.s32.totalorder %s182, %s184
      %p188 = scmp.eq.s32.totalorder %s22, 0
      %p189 = por %p187, %p188
      %p190 = scmp.ne.s32.totalorder %s182, %s184
      %p191 = scmp.eq.s32.totalorder %s27, 1
      %p192 = por %p190, %p191
      %p193 = scmp.ne.s32.totalorder %s184, %s185
      %p194 = scmp.eq.s32.totalorder %s27, 0
      %p195 = por %p193, %p194
      %p196 = scmp.ne.s32.totalorder %s184, %s185
      %p197 = scmp.eq.s32.totalorder %s28, 1
      %p198 = por %p196, %p197
      %p200 = scmp.ne.s32.totalorder %s185, %s199
      %p201 = scmp.eq.s32.totalorder %s28, 0
      %p202 = por %p200, %p201
      %s204 = sadd.s32 %s203, 1
      %p207 = scmp.eq.s32.totalorder %s22, 1
      %p208 = scmp.ne.s32.totalorder %s203, %s205
      %p209 = scmp.eq.s32.totalorder %s22, 0
      %p210 = por %p208, %p209
      %p211 = scmp.ne.s32.totalorder %s203, %s205
      %p212 = scmp.eq.s32.totalorder %s27, 1
      %p213 = por %p211, %p212
      %p214 = scmp.ne.s32.totalorder %s205, %s206
      %p215 = scmp.eq.s32.totalorder %s27, 0
      %p216 = por %p214, %p215
      %p217 = scmp.ne.s32.totalorder %s205, %s206
      %p218 = scmp.eq.s32.totalorder %s28, 1
      %p219 = por %p217, %p218
      %p221 = scmp.ne.s32.totalorder %s206, %s220
      %p222 = scmp.eq.s32.totalorder %s28, 0
      %p223 = por %p221, %p222
      %s225 = sadd.s32 %s224, 1
      %p228 = scmp.eq.s32.totalorder %s22, 1
      %p229 = scmp.ne.s32.totalorder %s224, %s226
      %p230 = scmp.eq.s32.totalorder %s22, 0
      %p231 = por %p229, %p230
      %p232 = scmp.ne.s32.totalorder %s224, %s226
      %p233 = scmp.eq.s32.totalorder %s27, 1
      %p234 = por %p232, %p233
      %p235 = scmp.ne.s32.totalorder %s226, %s227
      %p236 = scmp.eq.s32.totalorder %s27, 0
      %p237 = por %p235, %p236
      %p238 = scmp.ne.s32.totalorder %s226, %s227
      %p239 = scmp.eq.s32.totalorder %s28, 1
      %p240 = por %p238, %p239
      %p242 = scmp.ne.s32.totalorder %s227, %s241
      %p243 = scmp.eq.s32.totalorder %s28, 0
      %p244 = por %p242, %p243
      %s246 = sadd.s32 %s245, 1
      %p249 = scmp.eq.s32.totalorder %s22, 1
      %p250 = scmp.ne.s32.totalorder %s245, %s247
      %p251 = scmp.eq.s32.totalorder %s22, 0
      %p252 = por %p250, %p251
      %p253 = scmp.ne.s32.totalorder %s245, %s247
      %p254 = scmp.eq.s32.totalorder %s27, 1
      %p255 = por %p253, %p254
      %p256 = scmp.ne.s32.totalorder %s247, %s248
      %p257 = scmp.eq.s32.totalorder %s27, 0
      %p258 = por %p256, %p257
      %p259 = scmp.ne.s32.totalorder %s247, %s248
      %p260 = scmp.eq.s32.totalorder %s28, 1
      %p261 = por %p259, %p260
      %p263 = scmp.ne.s32.totalorder %s248, %s262
      %p264 = scmp.eq.s32.totalorder %s28, 0
      %p265 = por %p263, %p264
      %p266 = scmp.le.s32.totalorder 1, %s22
      %p267 = scmp.lt.s32.totalorder %s22, 3
      %p268 = pnand %p266, %p267
      %p269 = pneg %p268
      // Predicated region
      $region9: #{tpu_custom_call.1} parent=5 // pred_check
        _
      $region10: #{tpu_custom_call.1} parent=5 // pred_check_branch
        %271 = sbr.rel (%p268) target = $region12
      $region11: #{tpu_custom_call.1} parent=5 // pred_region
        %s272 = ssub.s32 %s22, 1
        // Predicated region
        $region13: #{tpu_custom_call.1} parent=11 // pred_check
          %p273 = pneg %p43
        $region14: #{tpu_custom_call.1} parent=11 // pred_check_branch
          %275 = sbr.rel (%p273) target = $region16
        $region15: #{tpu_custom_call.1} parent=11 // pred_region
          _
        $region16: #{tpu_custom_call.1} parent=11 // pred_fallthru
          _
        // Predicated region
        $region17: #{tpu_custom_call.1} parent=11 // pred_check
          %p276 = pneg %p90
        $region18: #{tpu_custom_call.1} parent=11 // pred_check_branch
          %278 = sbr.rel (%p276) target = $region20
        $region19: #{tpu_custom_call.1} parent=11 // pred_region
          %s280 = ssub.s32 384, 384
          %281 = vsyncadd [#allocation8], %s280
          %s283 = sshll.u32 [#allocation7], 4
          %s284 = int_to_ptr.vmem [resolvable:$true] %s283
          %286 = dma.hbm_to_vmem [thread:$0]  %s2, 384, %s284, [#allocation8]
        $region20: #{tpu_custom_call.1} parent=11 // pred_fallthru
          _
        // Predicated region
        $region21: #{tpu_custom_call.1} parent=11 // pred_check
          %p287 = pneg %p111
        $region22: #{tpu_custom_call.1} parent=11 // pred_check_branch
          %289 = sbr.rel (%p287) target = $region24
        $region23: #{tpu_custom_call.1} parent=11 // pred_region
          _
        $region24: #{tpu_custom_call.1} parent=11 // pred_fallthru
          _
        // Predicated region
        $region25: #{tpu_custom_call.1} parent=11 // pred_check
          %p290 = pneg %p132
        $region26: #{tpu_custom_call.1} parent=11 // pred_check_branch
          %292 = sbr.rel (%p290) target = $region28
        $region27: #{tpu_custom_call.1} parent=11 // pred_region
          %s294 = ssub.s32 6144, 6144
          %295 = vsyncadd [#allocation8], %s294
          %s296 = sshll.u32 [#allocation9], 4
          %s297 = int_to_ptr.vmem [resolvable:$true] %s296
          %302 = dma.hbm_to_vmem [thread:$0]  %s4, 6144, %s297, [#allocation8], 384, 384, 24
        $region28: #{tpu_custom_call.1} parent=11 // pred_fallthru
          _
        // Predicated region
        $region29: #{tpu_custom_call.1} parent=11 // pred_check
          %p303 = pneg %p153
        $region30: #{tpu_custom_call.1} parent=11 // pred_check_branch
          %305 = sbr.rel (%p303) target = $region32
        $region31: #{tpu_custom_call.1} parent=11 // pred_region
          _
        $region32: #{tpu_custom_call.1} parent=11 // pred_fallthru
          _
        // Predicated region
        $region33: #{tpu_custom_call.1} parent=11 // pred_check
          %p306 = pneg %p174
        $region34: #{tpu_custom_call.1} parent=11 // pred_check_branch
          %308 = sbr.rel (%p306) target = $region36
        $region35: #{tpu_custom_call.1} parent=11 // pred_region
          %s310 = ssub.s32 2048, 2048
          %311 = vsyncadd [#allocation11], %s310
          %s312 = sshll.u32 [#allocation10], 4
          %s313 = int_to_ptr.vmem [resolvable:$true] %s312
          %318 = dma.hbm_to_vmem [thread:$0]  %s6, 2048, %s313, [#allocation11], 128, 128, 8
        $region36: #{tpu_custom_call.1} parent=11 // pred_fallthru
          _
        // Predicated region
        $region37: #{tpu_custom_call.1} parent=11 // pred_check
          %p319 = pneg %p195
        $region38: #{tpu_custom_call.1} parent=11 // pred_check_branch
          %321 = sbr.rel (%p319) target = $region40
        $region39: #{tpu_custom_call.1} parent=11 // pred_region
          _
        $region40: #{tpu_custom_call.1} parent=11 // pred_fallthru
          _
        // Predicated region
        $region41: #{tpu_custom_call.1} parent=11 // pred_check
          %p322 = pneg %p216
        $region42: #{tpu_custom_call.1} parent=11 // pred_check_branch
          %324 = sbr.rel (%p322) target = $region44
        $region43: #{tpu_custom_call.1} parent=11 // pred_region
          %s326 = ssub.s32 2048, 2048
          %327 = vsyncadd [#allocation11], %s326
          %s328 = sshll.u32 [#allocation12], 4
          %s329 = int_to_ptr.vmem [resolvable:$true] %s328
          %334 = dma.hbm_to_vmem [thread:$0]  %s8, 2048, %s329, [#allocation11], 128, 128, 8
        $region44: #{tpu_custom_call.1} parent=11 // pred_fallthru
          _
        // Predicated region
        $region45: #{tpu_custom_call.1} parent=11 // pred_check
          %p335 = pneg %p237
        $region46: #{tpu_custom_call.1} parent=11 // pred_check_branch
          %337 = sbr.rel (%p335) target = $region48
        $region47: #{tpu_custom_call.1} parent=11 // pred_region
          _
        $region48: #{tpu_custom_call.1} parent=11 // pred_fallthru
          _
      $region12: #{tpu_custom_call.1} parent=5 // pred_fallthru
        _
      %p338 = scmp.lt.s32.totalorder %s22, 2
      // Predicated region
      $region49: #{tpu_custom_call.1} parent=5 // pred_check
        %p339 = pneg %p338
      $region50: #{tpu_custom_call.1} parent=5 // pred_check_branch
        %341 = sbr.rel (%p339) target = $region52
      $region51: #{tpu_custom_call.1} parent=5 // pred_region
        // Predicated region
        $region53: #{tpu_custom_call.1} parent=51 // pred_check
          %p342 = pneg %p63
        $region54: #{tpu_custom_call.1} parent=51 // pred_check_branch
          %344 = sbr.rel (%p342) target = $region56
        $region55: #{tpu_custom_call.1} parent=51 // pred_region
          %s345 = sand.u32 %s53, 1
          %s346 = scalar_lea.sflag [#allocation5], %s345
          %s347 = sand.u32 %s53, 1
          %s348 = smul.addr %s347, 32
          %s349 = scalar_lea.vmem [#allocation4], %s348
          %s350 = smul.u32 4, %s22
          %s352 = ssub.s32 512, 512
          %353 = vsyncadd %s346, %s352
          %s354 = smul.addr %s350, 128
          %s355 = scalar_lea.hbm %s1, %s354
          %s356 = sshll.u32 %s349, 4
          %s357 = int_to_ptr.vmem [resolvable:$true] %s356
          %362 = dma.hbm_to_vmem [thread:$0]  %s355, 512, %s357, %s346, 128, 128, 8
        $region56: #{tpu_custom_call.1} parent=51 // pred_fallthru
          _
      $region52: #{tpu_custom_call.1} parent=5 // pred_fallthru
        _
      %p363 = scmp.le.s32.totalorder 1, %s22
      %p364 = scmp.lt.s32.totalorder %s22, 3
      %p365 = pnand %p363, %p364
      %p366 = pneg %p365
      // Predicated region
      $region57: #{tpu_custom_call.1} parent=5 // pred_check
        _
      $region58: #{tpu_custom_call.1} parent=5 // pred_check_branch
        %368 = sbr.rel (%p365) target = $region60
      $region59: #{tpu_custom_call.1} parent=5 // pred_region
        %s369 = ssub.s32 %s22, 1
        %s370 = sand.u32 %s56, 1
        %s371 = scalar_lea.sflag [#allocation5], %s370
        %s372 = sand.u32 %s56, 1
        %s373 = smul.addr %s372, 32
        %s374 = scalar_lea.vmem [#allocation4], %s373
        // Predicated region
        $region61: #{tpu_custom_call.1} parent=59 // pred_check
          %p375 = pneg %p69
        $region62: #{tpu_custom_call.1} parent=59 // pred_check_branch
          %377 = sbr.rel (%p375) target = $region64
        $region63: #{tpu_custom_call.1} parent=59 // pred_region
          %378 = dma.done %s371, 512
        $region64: #{tpu_custom_call.1} parent=59 // pred_fallthru
          _
        // Predicated region
        $region65: #{tpu_custom_call.1} parent=59 // pred_check
          %p379 = pneg %p90
        $region66: #{tpu_custom_call.1} parent=59 // pred_check_branch
          %381 = sbr.rel (%p379) target = $region68
        $region67: #{tpu_custom_call.1} parent=59 // pred_region
          %382 = dma.done [#allocation8], 384
        $region68: #{tpu_custom_call.1} parent=59 // pred_fallthru
          _
        // Predicated region
        $region69: #{tpu_custom_call.1} parent=59 // pred_check
          %p383 = pneg %p132
        $region70: #{tpu_custom_call.1} parent=59 // pred_check_branch
          %385 = sbr.rel (%p383) target = $region72
        $region71: #{tpu_custom_call.1} parent=59 // pred_region
          %386 = dma.done [#allocation8], 6144
        $region72: #{tpu_custom_call.1} parent=59 // pred_fallthru
          _
        // Predicated region
        $region73: #{tpu_custom_call.1} parent=59 // pred_check
          %p387 = pneg %p174
        $region74: #{tpu_custom_call.1} parent=59 // pred_check_branch
          %389 = sbr.rel (%p387) target = $region76
        $region75: #{tpu_custom_call.1} parent=59 // pred_region
          %390 = dma.done [#allocation11], 2048
        $region76: #{tpu_custom_call.1} parent=59 // pred_fallthru
          _
        // Predicated region
        $region77: #{tpu_custom_call.1} parent=59 // pred_check
          %p391 = pneg %p216
        $region78: #{tpu_custom_call.1} parent=59 // pred_check_branch
          %393 = sbr.rel (%p391) target = $region80
        $region79: #{tpu_custom_call.1} parent=59 // pred_region
          %394 = dma.done [#allocation11], 2048
        $region80: #{tpu_custom_call.1} parent=59 // pred_fallthru
          _
        %p395 = pneg %p43
        %p396 = pneg %p40
        %s397 = sand.u32 %s56, 1
        %s398 = scalar_lea.sflag [#allocation5], %s397
        %s399 = sand.u32 %s56, 1
        %s400 = smul.addr %s399, 32
        %s401 = scalar_lea.vmem [#allocation4], %s400
        %p402 = pneg %p69
        %p403 = pneg %p66
        %p404 = pneg %p90
        %p405 = pneg %p87
        %p406 = pneg %p111
        %p407 = pneg %p108
        %p408 = pneg %p132
        %p409 = pneg %p129
        %p410 = pneg %p153
        %p411 = pneg %p150
        %p412 = pneg %p174
        %p413 = pneg %p171
        %p414 = pneg %p195
        %p415 = pneg %p192
        %p416 = pneg %p216
        %p417 = pneg %p213
        %p418 = pneg %p237
        %p419 = pneg %p234
        %p420 = pneg %p258
        %p421 = pneg %p255
        %s422 = smul.u32 4, %s27
        %p423 = scmp.eq.s32.totalorder %s27, 0
        // Predicated region
        $region81: #{tpu_custom_call.1} parent=59 // pred_check
          %p424 = pneg %p423
        $region82: #{tpu_custom_call.1} parent=59 // pred_check_branch
          %426 = sbr.rel (%p424) target = $region84
        $region83: #{tpu_custom_call.1} parent=59 // pred_region
          %427 = vst [vmem:[#allocation2] sm:$0xff] 0.0
        $region84: #{tpu_custom_call.1} parent=59 // pred_fallthru
          _
        %v428 = vld [vmem:[%s374] sm:$0xff]
        %v429 = vld [vmem:[%s374 + $0x8] sm:$0xff]
        %v430 = vld [vmem:[%s374 + $0x10] sm:$0xff]
        %v431 = vld [vmem:[%s374 + $0x18] sm:$0xff]
        %v432 = vld [vmem:[#allocation7] sm:$0xff]
        %v433 = vld [vmem:[#allocation7 + $0x8] sm:$0xff]
        %v434 = vld [vmem:[#allocation7 + $0x10] sm:$0xff]
        %v435 = vld [vmem:[%s3] sm:$0x7]
        %v437 = vlaneseq
        %v438 = vshrl.u32 %v437, 7
        %v439 = vsub.s32 0, %v438
        %v440 = vrot.slane %v435, %v439
        %v441 = vlaneseq
        %v442 = vshrl.u32 %v441, 7
        %v443 = vsub.s32 1, %v442
        %v444 = vrot.slane %v435, %v443
        %v445 = vlaneseq
        %v446 = vshrl.u32 %v445, 7
        %v447 = vsub.s32 2, %v446
        %v448 = vrot.slane %v435, %v447
        %vm452 = vcmask 64512
        %v454 = vsel %vm452, %v428, 0
        %v457 = vsel %vm452, %v429, 0
        %v460 = vsel %vm452, %v430, 0
        %v463 = vsel %vm452, %v431, 0
        %465 = vmatprep.subr.mxu0 %v433
        %466 = vmatpush1.msra.mxu0 %v432
        %467 = vmatprep.subr.mxu0 0.0
        %468 = vmatpush1.msra.mxu0 0.0
        %469 = vmatprep.subr.mxu0 0.0
        %470 = vmatpush1.msra.mxu0 0.0
        %471 = vmatprep.subr.mxu0 0.0
        %472 = vmatpush1.msra.mxu0 0.0
        %473 = vmatprep.subr.mxu0 0.0
        %474 = vmatpush1.msra.mxu0 0.0
        %475 = vmatprep.subr.mxu0 0.0
        %476 = vmatpush1.msra.mxu0 0.0
        %477 = vmatprep.subr.mxu0 0.0
        %478 = vmatpush1.msra.mxu0 0.0
        %479 = vmatprep.subr.mxu0 0.0
        %480 = vmatpush1.msra.mxu0 0.0
        %481 = vmatprep.subr.mxu0 0.0
        %482 = vmatpush1.msra.mxu0 0.0
        %483 = vmatprep.subr.mxu0 0.0
        %484 = vmatpush1.msra.mxu0 0.0
        %485 = vmatprep.subr.mxu0 0.0
        %486 = vmatpush1.msra.mxu0 0.0
        %487 = vmatprep.subr.mxu0 0.0
        %488 = vmatpush1.msra.mxu0 0.0
        %489 = vmatprep.subr.mxu0 0.0
        %490 = vmatpush1.msra.mxu0 0.0
        %491 = vmatprep.subr.mxu0 0.0
        %492 = vmatpush1.msra.mxu0 0.0
        %493 = vmatprep.subr.mxu0 0.0
        %494 = vmatpush1.msra.mxu0 0.0
        %495 = vmatprep.subr.mxu0 0.0
        %496 = vmatpush1.msra.mxu0 0.0
        %497 = vmatprep.subr.mxu0 0.0
        %498 = vmatpush1.msra.mxu0 0.0
        %499 = vmatprep.subr.mxu0 0.0
        %500 = vmatpush1.msra.mxu0 0.0
        %501 = vmatprep.subr.mxu0 0.0
        %502 = vmatpush1.msra.mxu0 0.0
        %503 = vmatprep.subr.mxu0 0.0
        %504 = vmatpush1.msra.mxu0 0.0
        %505 = vmatprep.subr.mxu0 0.0
        %506 = vmatpush1.msra.mxu0 0.0
        %507 = vmatprep.subr.mxu0 0.0
        %508 = vmatpush1.msra.mxu0 0.0
        %509 = vmatprep.subr.mxu0 0.0
        %510 = vmatpush1.msra.mxu0 0.0
        %511 = vmatprep.subr.mxu0 0.0
        %512 = vmatpush1.msra.mxu0 0.0
        %513 = vmatprep.subr.mxu0 0.0
        %514 = vmatpush1.msra.mxu0 0.0
        %515 = vmatprep.subr.mxu0 0.0
        %516 = vmatpush1.msra.mxu0 0.0
        %517 = vmatprep.subr.mxu0 0.0
        %518 = vmatpush1.msra.mxu0 0.0
        %519 = vmatprep.subr.mxu0 0.0
        %520 = vmatpush1.msra.mxu0 0.0
        %521 = vmatprep.subr.mxu0 0.0
        %522 = vmatpush1.msra.mxu0 0.0
        %523 = vmatprep.subr.mxu0 0.0
        %524 = vmatpush1.msra.mxu0 0.0
        %525 = vmatprep.subr.mxu0 0.0
        %526 = vmatpush1.msra.mxu0 0.0
        %527 = vmatprep.subr.mxu0 0.0
        %528 = vmatpush1.msra.mxu0 0.0
        %529 = vmatprep.mubr.f32.mxu0 0.0
        %530 = vmatmul.mubr.f32.gmra.mrb[0].mxu0 %v454
        %v531 = vpop.f32.mrb[0].mxu0
        %v532 = vadd.f32 %v440, %v531
        %v533 = vpop.f32.mrb[0].mxu0
        %v534 = vadd.f32 %v444, %v533
        %535 = vmatprep.mubr.f32.mxu0 0.0
        %536 = vmatmul.mubr.f32.gmra.mrb[0].mxu0 %v457
        %v537 = vpop.f32.mrb[0].mxu0
        %v538 = vadd.f32 %v440, %v537
        %v539 = vpop.f32.mrb[0].mxu0
        %v540 = vadd.f32 %v444, %v539
        %541 = vmatprep.mubr.f32.mxu0 0.0
        %542 = vmatmul.mubr.f32.gmra.mrb[0].mxu0 %v460
        %v543 = vpop.f32.mrb[0].mxu0
        %v544 = vadd.f32 %v440, %v543
        %v545 = vpop.f32.mrb[0].mxu0
        %v546 = vadd.f32 %v444, %v545
        %547 = vmatprep.mubr.f32.mxu0 0.0
        %548 = vmatmul.mubr.f32.gmra.mrb[0].mxu0 %v463
        %v549 = vpop.f32.mrb[0].mxu0
        %v550 = vadd.f32 %v440, %v549
        %v551 = vpop.f32.mrb[0].mxu0
        %v552 = vadd.f32 %v444, %v551
        %553 = vdwg.mxu0
        %554 = vmatprep.subr.mxu0 0.0
        %555 = vmatpush1.msra.mxu0 %v434
        %556 = vmatprep.subr.mxu0 0.0
        %557 = vmatpush1.msra.mxu0 0.0
        %558 = vmatprep.subr.mxu0 0.0
        %559 = vmatpush1.msra.mxu0 0.0
        %560 = vmatprep.subr.mxu0 0.0
        %561 = vmatpush1.msra.mxu0 0.0
        %562 = vmatprep.subr.mxu0 0.0
        %563 = vmatpush1.msra.mxu0 0.0
        %564 = vmatprep.subr.mxu0 0.0
        %565 = vmatpush1.msra.mxu0 0.0
        %566 = vmatprep.subr.mxu0 0.0
        %567 = vmatpush1.msra.mxu0 0.0
        %568 = vmatprep.subr.mxu0 0.0
        %569 = vmatpush1.msra.mxu0 0.0
        %570 = vmatprep.subr.mxu0 0.0
        %571 = vmatpush1.msra.mxu0 0.0
        %572 = vmatprep.subr.mxu0 0.0
        %573 = vmatpush1.msra.mxu0 0.0
        %574 = vmatprep.subr.mxu0 0.0
        %575 = vmatpush1.msra.mxu0 0.0
        %576 = vmatprep.subr.mxu0 0.0
        %577 = vmatpush1.msra.mxu0 0.0
        %578 = vmatprep.subr.mxu0 0.0
        %579 = vmatpush1.msra.mxu0 0.0
        %580 = vmatprep.subr.mxu0 0.0
        %581 = vmatpush1.msra.mxu0 0.0
        %582 = vmatprep.subr.mxu0 0.0
        %583 = vmatpush1.msra.mxu0 0.0
        %584 = vmatprep.subr.mxu0 0.0
        %585 = vmatpush1.msra.mxu0 0.0
        %586 = vmatprep.subr.mxu0 0.0
        %587 = vmatpush1.msra.mxu0 0.0
        %588 = vmatprep.subr.mxu0 0.0
        %589 = vmatpush1.msra.mxu0 0.0
        %590 = vmatprep.subr.mxu0 0.0
        %591 = vmatpush1.msra.mxu0 0.0
        %592 = vmatprep.subr.mxu0 0.0
        %593 = vmatpush1.msra.mxu0 0.0
        %594 = vmatprep.subr.mxu0 0.0
        %595 = vmatpush1.msra.mxu0 0.0
        %596 = vmatprep.subr.mxu0 0.0
        %597 = vmatpush1.msra.mxu0 0.0
        %598 = vmatprep.subr.mxu0 0.0
        %599 = vmatpush1.msra.mxu0 0.0
        %600 = vmatprep.subr.mxu0 0.0
        %601 = vmatpush1.msra.mxu0 0.0
        %602 = vmatprep.subr.mxu0 0.0
        %603 = vmatpush1.msra.mxu0 0.0
        %604 = vmatprep.subr.mxu0 0.0
        %605 = vmatpush1.msra.mxu0 0.0
        %606 = vmatprep.subr.mxu0 0.0
        %607 = vmatpush1.msra.mxu0 0.0
        %608 = vmatprep.subr.mxu0 0.0
        %609 = vmatpush1.msra.mxu0 0.0
        %610 = vmatprep.subr.mxu0 0.0
        %611 = vmatpush1.msra.mxu0 0.0
        %612 = vmatprep.subr.mxu0 0.0
        %613 = vmatpush1.msra.mxu0 0.0
        %614 = vmatprep.subr.mxu0 0.0
        %615 = vmatpush1.msra.mxu0 0.0
        %616 = vmatprep.subr.mxu0 0.0
        %617 = vmatpush1.msra.mxu0 0.0
        %618 = vmatprep.mubr.f32.mxu0 0.0
        %619 = vmatmul.mubr.f32.gmra.mrb[0].mxu0 %v454
        %v620 = vpop.f32.mrb[0].mxu0
        %v621 = vadd.f32 %v448, %v620
        %v622 = vpop.f32.mrb[0].mxu0
        %623 = vmatprep.mubr.f32.mxu0 0.0
        %624 = vmatmul.mubr.f32.gmra.mrb[0].mxu0 %v457
        %v625 = vpop.f32.mrb[0].mxu0
        %v626 = vadd.f32 %v448, %v625
        %v627 = vpop.f32.mrb[0].mxu0
        %628 = vmatprep.mubr.f32.mxu0 0.0
        %629 = vmatmul.mubr.f32.gmra.mrb[0].mxu0 %v460
        %v630 = vpop.f32.mrb[0].mxu0
        %v631 = vadd.f32 %v448, %v630
        %v632 = vpop.f32.mrb[0].mxu0
        %633 = vmatprep.mubr.f32.mxu0 0.0
        %634 = vmatmul.mubr.f32.gmra.mrb[0].mxu0 %v463
        %v635 = vpop.f32.mrb[0].mxu0
        %v636 = vadd.f32 %v448, %v635
        %v637 = vpop.f32.mrb[0].mxu0
        %638 = vdwg.mxu0
        %639 = vst [vmem:[#allocation3] sm:$0xff] %v532
        %640 = vst [vmem:[#allocation3 + $0x8] sm:$0xff] %v534
        %641 = vst [vmem:[#allocation3 + $0x10] sm:$0xff] %v621
        %642 = vst [vmem:[#allocation3 + $0x18] sm:$0xff] %v538
        %643 = vst [vmem:[#allocation3 + $0x20] sm:$0xff] %v540
        %644 = vst [vmem:[#allocation3 + $0x28] sm:$0xff] %v626
        %645 = vst [vmem:[#allocation3 + $0x30] sm:$0xff] %v544
        %646 = vst [vmem:[#allocation3 + $0x38] sm:$0xff] %v546
        %647 = vst [vmem:[#allocation3 + $0x40] sm:$0xff] %v631
        %648 = vst [vmem:[#allocation3 + $0x48] sm:$0xff] %v550
        %649 = vst [vmem:[#allocation3 + $0x50] sm:$0xff] %v552
        %650 = vst [vmem:[#allocation3 + $0x58] sm:$0xff] %v636
        %v651 = vld [vmem:[%s0] sm:$0xff]
        %s652 = smul.u32 %s27, 4
        %v653 = vstv %s652
        %v654 = vsub.s32 %v651, %v653
        %v655 = vld [vmem:[#allocation2] sm:$0xff]
        %s656 = smul.u32 0, 3
        %s657 = smul.addr %s656, 8
        %s658 = scalar_lea.vmem [#allocation3], %s657
        %v659 = vld [vmem:[%s658] sm:$0xff]
        %v660 = vld [vmem:[%s658 + $0x8] sm:$0xff]
        %v661 = vld [vmem:[%s658 + $0x10] sm:$0xff]
        %v662 = vld [vmem:[#allocation9] sm:$0xff]
        %v663 = vld [vmem:[#allocation9 + $0x8] sm:$0xff]
        %v664 = vld [vmem:[#allocation9 + $0x10] sm:$0xff]
        %v665 = vld [vmem:[#allocation9 + $0x18] sm:$0xff]
        %v666 = vld [vmem:[#allocation9 + $0x20] sm:$0xff]
        %v667 = vld [vmem:[#allocation9 + $0x28] sm:$0xff]
        %v668 = vld [vmem:[#allocation9 + $0x30] sm:$0xff]
        %v669 = vld [vmem:[#allocation9 + $0x38] sm:$0xff]
        %v670 = vld [vmem:[#allocation9 + $0x40] sm:$0xff]
        %v671 = vld [vmem:[#allocation9 + $0x48] sm:$0xff]
        %v672 = vld [vmem:[#allocation9 + $0x50] sm:$0xff]
        %v673 = vld [vmem:[#allocation9 + $0x58] sm:$0xff]
        %v674 = vld [vmem:[#allocation9 + $0x60] sm:$0xff]
        %v675 = vld [vmem:[#allocation9 + $0x68] sm:$0xff]
        %v676 = vld [vmem:[#allocation9 + $0x70] sm:$0xff]
        %v677 = vld [vmem:[#allocation9 + $0x78] sm:$0xff]
        %v678 = vld [vmem:[#allocation9 + $0x80] sm:$0xff]
        %v679 = vld [vmem:[#allocation9 + $0x88] sm:$0xff]
        %v680 = vld [vmem:[#allocation9 + $0x90] sm:$0xff]
        %v681 = vld [vmem:[#allocation9 + $0x98] sm:$0xff]
        %v682 = vld [vmem:[#allocation9 + $0xa0] sm:$0xff]
        %v683 = vld [vmem:[#allocation9 + $0xa8] sm:$0xff]
        %v684 = vld [vmem:[#allocation9 + $0xb0] sm:$0xff]
        %v685 = vld [vmem:[#allocation9 + $0xb8] sm:$0xff]
        %v686 = vld [vmem:[#allocation9 + $0xc0] sm:$0xff]
        %v687 = vld [vmem:[#allocation9 + $0xc8] sm:$0xff]
        %v688 = vld [vmem:[#allocation9 + $0xd0] sm:$0xff]
        %v689 = vld [vmem:[#allocation9 + $0xd8] sm:$0xff]
        %v690 = vld [vmem:[#allocation9 + $0xe0] sm:$0xff]
        %v691 = vld [vmem:[#allocation9 + $0xe8] sm:$0xff]
        %v692 = vld [vmem:[#allocation9 + $0xf0] sm:$0xff]
        %v693 = vld [vmem:[#allocation9 + $0xf8] sm:$0xff]
        %v694 = vld [vmem:[#allocation9 + $0x100] sm:$0xff]
        %v695 = vld [vmem:[#allocation9 + $0x108] sm:$0xff]
        %v696 = vld [vmem:[#allocation9 + $0x110] sm:$0xff]
        %v697 = vld [vmem:[#allocation9 + $0x118] sm:$0xff]
        %v698 = vld [vmem:[#allocation9 + $0x120] sm:$0xff]
        %v699 = vld [vmem:[#allocation9 + $0x128] sm:$0xff]
        %v700 = vld [vmem:[#allocation9 + $0x130] sm:$0xff]
        %v701 = vld [vmem:[#allocation9 + $0x138] sm:$0xff]
        %v702 = vld [vmem:[#allocation9 + $0x140] sm:$0xff]
        %v703 = vld [vmem:[#allocation9 + $0x148] sm:$0xff]
        %v704 = vld [vmem:[#allocation9 + $0x150] sm:$0xff]
        %v705 = vld [vmem:[#allocation9 + $0x158] sm:$0xff]
        %v706 = vld [vmem:[#allocation9 + $0x160] sm:$0xff]
        %v707 = vld [vmem:[#allocation9 + $0x168] sm:$0xff]
        %v708 = vld [vmem:[#allocation9 + $0x170] sm:$0xff]
        %v709 = vld [vmem:[#allocation9 + $0x178] sm:$0xff]
        %v710 = vld [vmem:[%s5] sm:$0x7]
        %v712 = vlaneseq
        %v713 = vshrl.u32 %v712, 7
        %v714 = vsub.s32 0, %v713
        %v715 = vrot.slane %v710, %v714
        %v716 = vlaneseq
        %v717 = vshrl.u32 %v716, 7
        %v718 = vsub.s32 1, %v717
        %v719 = vrot.slane %v710, %v718
        %v720 = vlaneseq
        %v721 = vshrl.u32 %v720, 7
        %v722 = vsub.s32 2, %v721
        %v723 = vrot.slane %v710, %v722
        %727 = vmatprep.subr.mxu0 %v663
        %728 = vmatpush1.msra.mxu0 %v662
        %729 = vmatprep.subr.mxu0 %v666
        %730 = vmatpush1.msra.mxu0 %v665
        %731 = vmatprep.subr.mxu0 %v669
        %732 = vmatpush1.msra.mxu0 %v668
        %733 = vmatprep.subr.mxu0 %v672
        %734 = vmatpush1.msra.mxu0 %v671
        %735 = vmatprep.subr.mxu0 %v675
        %736 = vmatpush1.msra.mxu0 %v674
        %737 = vmatprep.subr.mxu0 %v678
        %738 = vmatpush1.msra.mxu0 %v677
        %739 = vmatprep.subr.mxu0 %v681
        %740 = vmatpush1.msra.mxu0 %v680
        %741 = vmatprep.subr.mxu0 %v684
        %742 = vmatpush1.msra.mxu0 %v683
        %743 = vmatprep.subr.mxu0 %v687
        %744 = vmatpush1.msra.mxu0 %v686
        %745 = vmatprep.subr.mxu0 %v690
        %746 = vmatpush1.msra.mxu0 %v689
        %747 = vmatprep.subr.mxu0 %v693
        %748 = vmatpush1.msra.mxu0 %v692
        %749 = vmatprep.subr.mxu0 %v696
        %750 = vmatpush1.msra.mxu0 %v695
        %751 = vmatprep.subr.mxu0 %v699
        %752 = vmatpush1.msra.mxu0 %v698
        %753 = vmatprep.subr.mxu0 %v702
        %754 = vmatpush1.msra.mxu0 %v701
        %755 = vmatprep.subr.mxu0 %v705
        %756 = vmatpush1.msra.mxu0 %v704
        %757 = vmatprep.subr.mxu0 %v708
        %758 = vmatpush1.msra.mxu0 %v707
        %759 = vmatprep.subr.mxu0 0.0
        %760 = vmatpush1.msra.mxu0 0.0
        %761 = vmatprep.subr.mxu0 0.0
        %762 = vmatpush1.msra.mxu0 0.0
        %763 = vmatprep.subr.mxu0 0.0
        %764 = vmatpush1.msra.mxu0 0.0
        %765 = vmatprep.subr.mxu0 0.0
        %766 = vmatpush1.msra.mxu0 0.0
        %767 = vmatprep.subr.mxu0 0.0
        %768 = vmatpush1.msra.mxu0 0.0
        %769 = vmatprep.subr.mxu0 0.0
        %770 = vmatpush1.msra.mxu0 0.0
        %771 = vmatprep.subr.mxu0 0.0
        %772 = vmatpush1.msra.mxu0 0.0
        %773 = vmatprep.subr.mxu0 0.0
        %774 = vmatpush1.msra.mxu0 0.0
        %775 = vmatprep.subr.mxu0 0.0
        %776 = vmatpush1.msra.mxu0 0.0
        %777 = vmatprep.subr.mxu0 0.0
        %778 = vmatpush1.msra.mxu0 0.0
        %779 = vmatprep.subr.mxu0 0.0
        %780 = vmatpush1.msra.mxu0 0.0
        %781 = vmatprep.subr.mxu0 0.0
        %782 = vmatpush1.msra.mxu0 0.0
        %783 = vmatprep.subr.mxu0 0.0
        %784 = vmatpush1.msra.mxu0 0.0
        %785 = vmatprep.subr.mxu0 0.0
        %786 = vmatpush1.msra.mxu0 0.0
        %787 = vmatprep.subr.mxu0 0.0
        %788 = vmatpush1.msra.mxu0 0.0
        %789 = vmatprep.subr.mxu0 0.0
        %790 = vmatpush1.msra.mxu0 0.0
        %791 = vmatprep.mubr.f32.mxu0 0.0
        %792 = vmatmul.mubr.f32.gmra.mrb[0].mxu0 %v655
        %v793 = vpop.f32.mrb[0].mxu0
        %v794 = vadd.f32 %v715, %v793
        %v795 = vpop.f32.mrb[0].mxu0
        %v796 = vadd.f32 %v719, %v795
        %797 = vdwg.mxu0
        %798 = vmatprep.subr.mxu0 0.0
        %799 = vmatpush1.msra.mxu0 %v664
        %800 = vmatprep.subr.mxu0 0.0
        %801 = vmatpush1.msra.mxu0 %v667
        %802 = vmatprep.subr.mxu0 0.0
        %803 = vmatpush1.msra.mxu0 %v670
        %804 = vmatprep.subr.mxu0 0.0
        %805 = vmatpush1.msra.mxu0 %v673
        %806 = vmatprep.subr.mxu0 0.0
        %807 = vmatpush1.msra.mxu0 %v676
        %808 = vmatprep.subr.mxu0 0.0
        %809 = vmatpush1.msra.mxu0 %v679
        %810 = vmatprep.subr.mxu0 0.0
        %811 = vmatpush1.msra.mxu0 %v682
        %812 = vmatprep.subr.mxu0 0.0
        %813 = vmatpush1.msra.mxu0 %v685
        %814 = vmatprep.subr.mxu0 0.0
        %815 = vmatpush1.msra.mxu0 %v688
        %816 = vmatprep.subr.mxu0 0.0
        %817 = vmatpush1.msra.mxu0 %v691
        %818 = vmatprep.subr.mxu0 0.0
        %819 = vmatpush1.msra.mxu0 %v694
        %820 = vmatprep.subr.mxu0 0.0
        %821 = vmatpush1.msra.mxu0 %v697
        %822 = vmatprep.subr.mxu0 0.0
        %823 = vmatpush1.msra.mxu0 %v700
        %824 = vmatprep.subr.mxu0 0.0
        %825 = vmatpush1.msra.mxu0 %v703
        %826 = vmatprep.subr.mxu0 0.0
        %827 = vmatpush1.msra.mxu0 %v706
        %828 = vmatprep.subr.mxu0 0.0
        %829 = vmatpush1.msra.mxu0 %v709
        %830 = vmatprep.subr.mxu0 0.0
        %831 = vmatpush1.msra.mxu0 0.0
        %832 = vmatprep.subr.mxu0 0.0
        %833 = vmatpush1.msra.mxu0 0.0
        %834 = vmatprep.subr.mxu0 0.0
        %835 = vmatpush1.msra.mxu0 0.0
        %836 = vmatprep.subr.mxu0 0.0
        %837 = vmatpush1.msra.mxu0 0.0
        %838 = vmatprep.subr.mxu0 0.0
        %839 = vmatpush1.msra.mxu0 0.0
        %840 = vmatprep.subr.mxu0 0.0
        %841 = vmatpush1.msra.mxu0 0.0
        %842 = vmatprep.subr.mxu0 0.0
        %843 = vmatpush1.msra.mxu0 0.0
        %844 = vmatprep.subr.mxu0 0.0
        %845 = vmatpush1.msra.mxu0 0.0
        %846 = vmatprep.subr.mxu0 0.0
        %847 = vmatpush1.msra.mxu0 0.0
        %848 = vmatprep.subr.mxu0 0.0
        %849 = vmatpush1.msra.mxu0 0.0
        %850 = vmatprep.subr.mxu0 0.0
        %851 = vmatpush1.msra.mxu0 0.0
        %852 = vmatprep.subr.mxu0 0.0
        %853 = vmatpush1.msra.mxu0 0.0
        %854 = vmatprep.subr.mxu0 0.0
        %855 = vmatpush1.msra.mxu0 0.0
        %856 = vmatprep.subr.mxu0 0.0
        %857 = vmatpush1.msra.mxu0 0.0
        %858 = vmatprep.subr.mxu0 0.0
        %859 = vmatpush1.msra.mxu0 0.0
        %860 = vmatprep.subr.mxu0 0.0
        %861 = vmatpush1.msra.mxu0 0.0
        %862 = vmatprep.mubr.f32.mxu0 0.0
        %863 = vmatmul.mubr.f32.gmra.mrb[0].mxu0 %v655
        %v864 = vpop.f32.mrb[0].mxu0
        %v865 = vadd.f32 %v723, %v864
        %v866 = vpop.f32.mrb[0].mxu0
        %867 = vdwg.mxu0
        %v868 = vadd.f32 %v659, %v794
        %v869 = vxor.u32 %v868, 2147483648
        %v870 = vmul.f32 %v869, 1.442695
        %v871 = vpow.pop %v870
        %v872 = vadd.f32 %v871, 1.0
        %v873 = vrcp.pop %v872
        %v874 = vmul.f32 1.0, %v873
        %v875 = vadd.f32 %v660, %v796
        %v876 = vxor.u32 %v875, 2147483648
        %v877 = vmul.f32 %v876, 1.442695
        %v878 = vpow.pop %v877
        %v879 = vadd.f32 %v878, 1.0
        %v880 = vrcp.pop %v879
        %v881 = vmul.f32 1.0, %v880
        %v882 = vmul.f32 %v874, %v865
        %v883 = vadd.f32 %v661, %v882
        %v884 = vtanh.pop %v883
        %v885 = vsub.f32 1.0, %v881
        %v886 = vmul.f32 %v885, %v884
        %v887 = vmul.f32 %v881, %v655
        %v888 = vadd.f32 %v886, %v887
        %vm889 = vcmp.gt.s32.totalorder %v654, 0
        %v890 = vsel %vm889, 1, 0
        %891 = vset.pattern.permute.xlu0 0
        %892 = vperm.xlu0 %891, %v890
        %v893 = vpop.permute.xlu0 %892
        %vm894 = vcmp.eq.s32.totalorder %v893, 1
        %v895 = vsel %vm894, %v888, %v655
        %s896 = smul.u32 1, 3
        %s897 = smul.addr %s896, 8
        %s898 = scalar_lea.vmem [#allocation3], %s897
        %v899 = vld [vmem:[%s898] sm:$0xff]
        %v900 = vld [vmem:[%s898 + $0x8] sm:$0xff]
        %v901 = vld [vmem:[%s898 + $0x10] sm:$0xff]
        %902 = vmatprep.subr.mxu0 %v663
        %903 = vmatpush1.msra.mxu0 %v662
        %904 = vmatprep.subr.mxu0 %v666
        %905 = vmatpush1.msra.mxu0 %v665
        %906 = vmatprep.subr.mxu0 %v669
        %907 = vmatpush1.msra.mxu0 %v668
        %908 = vmatprep.subr.mxu0 %v672
        %909 = vmatpush1.msra.mxu0 %v671
        %910 = vmatprep.subr.mxu0 %v675
        %911 = vmatpush1.msra.mxu0 %v674
        %912 = vmatprep.subr.mxu0 %v678
        %913 = vmatpush1.msra.mxu0 %v677
        %914 = vmatprep.subr.mxu0 %v681
        %915 = vmatpush1.msra.mxu0 %v680
        %916 = vmatprep.subr.mxu0 %v684
        %917 = vmatpush1.msra.mxu0 %v683
        %918 = vmatprep.subr.mxu0 %v687
        %919 = vmatpush1.msra.mxu0 %v686
        %920 = vmatprep.subr.mxu0 %v690
        %921 = vmatpush1.msra.mxu0 %v689
        %922 = vmatprep.subr.mxu0 %v693
        %923 = vmatpush1.msra.mxu0 %v692
        %924 = vmatprep.subr.mxu0 %v696
        %925 = vmatpush1.msra.mxu0 %v695
        %926 = vmatprep.subr.mxu0 %v699
        %927 = vmatpush1.msra.mxu0 %v698
        %928 = vmatprep.subr.mxu0 %v702
        %929 = vmatpush1.msra.mxu0 %v701
        %930 = vmatprep.subr.mxu0 %v705
        %931 = vmatpush1.msra.mxu0 %v704
        %932 = vmatprep.subr.mxu0 %v708
        %933 = vmatpush1.msra.mxu0 %v707
        %934 = vmatprep.subr.mxu0 0.0
        %935 = vmatpush1.msra.mxu0 0.0
        %936 = vmatprep.subr.mxu0 0.0
        %937 = vmatpush1.msra.mxu0 0.0
        %938 = vmatprep.subr.mxu0 0.0
        %939 = vmatpush1.msra.mxu0 0.0
        %940 = vmatprep.subr.mxu0 0.0
        %941 = vmatpush1.msra.mxu0 0.0
        %942 = vmatprep.subr.mxu0 0.0
        %943 = vmatpush1.msra.mxu0 0.0
        %944 = vmatprep.subr.mxu0 0.0
        %945 = vmatpush1.msra.mxu0 0.0
        %946 = vmatprep.subr.mxu0 0.0
        %947 = vmatpush1.msra.mxu0 0.0
        %948 = vmatprep.subr.mxu0 0.0
        %949 = vmatpush1.msra.mxu0 0.0
        %950 = vmatprep.subr.mxu0 0.0
        %951 = vmatpush1.msra.mxu0 0.0
        %952 = vmatprep.subr.mxu0 0.0
        %953 = vmatpush1.msra.mxu0 0.0
        %954 = vmatprep.subr.mxu0 0.0
        %955 = vmatpush1.msra.mxu0 0.0
        %956 = vmatprep.subr.mxu0 0.0
        %957 = vmatpush1.msra.mxu0 0.0
        %958 = vmatprep.subr.mxu0 0.0
        %959 = vmatpush1.msra.mxu0 0.0
        %960 = vmatprep.subr.mxu0 0.0
        %961 = vmatpush1.msra.mxu0 0.0
        %962 = vmatprep.subr.mxu0 0.0
        %963 = vmatpush1.msra.mxu0 0.0
        %964 = vmatprep.subr.mxu0 0.0
        %965 = vmatpush1.msra.mxu0 0.0
        %966 = vmatprep.mubr.f32.mxu0 0.0
        %967 = vmatmul.mubr.f32.gmra.mrb[0].mxu0 %v895
        %v968 = vpop.f32.mrb[0].mxu0
        %v969 = vadd.f32 %v715, %v968
        %v970 = vpop.f32.mrb[0].mxu0
        %v971 = vadd.f32 %v719, %v970
        %972 = vdwg.mxu0
        %973 = vmatprep.subr.mxu0 0.0
        %974 = vmatpush1.msra.mxu0 %v664
        %975 = vmatprep.subr.mxu0 0.0
        %976 = vmatpush1.msra.mxu0 %v667
        %977 = vmatprep.subr.mxu0 0.0
        %978 = vmatpush1.msra.mxu0 %v670
        %979 = vmatprep.subr.mxu0 0.0
        %980 = vmatpush1.msra.mxu0 %v673
        %981 = vmatprep.subr.mxu0 0.0
        %982 = vmatpush1.msra.mxu0 %v676
        %983 = vmatprep.subr.mxu0 0.0
        %984 = vmatpush1.msra.mxu0 %v679
        %985 = vmatprep.subr.mxu0 0.0
        %986 = vmatpush1.msra.mxu0 %v682
        %987 = vmatprep.subr.mxu0 0.0
        %988 = vmatpush1.msra.mxu0 %v685
        %989 = vmatprep.subr.mxu0 0.0
        %990 = vmatpush1.msra.mxu0 %v688
        %991 = vmatprep.subr.mxu0 0.0
        %992 = vmatpush1.msra.mxu0 %v691
        %993 = vmatprep.subr.mxu0 0.0
        %994 = vmatpush1.msra.mxu0 %v694
        %995 = vmatprep.subr.mxu0 0.0
        %996 = vmatpush1.msra.mxu0 %v697
        %997 = vmatprep.subr.mxu0 0.0
        %998 = vmatpush1.msra.mxu0 %v700
        %999 = vmatprep.subr.mxu0 0.0
        %1000 = vmatpush1.msra.mxu0 %v703
        %1001 = vmatprep.subr.mxu0 0.0
        %1002 = vmatpush1.msra.mxu0 %v706
        %1003 = vmatprep.subr.mxu0 0.0
        %1004 = vmatpush1.msra.mxu0 %v709
        %1005 = vmatprep.subr.mxu0 0.0
        %1006 = vmatpush1.msra.mxu0 0.0
        %1007 = vmatprep.subr.mxu0 0.0
        %1008 = vmatpush1.msra.mxu0 0.0
        %1009 = vmatprep.subr.mxu0 0.0
        %1010 = vmatpush1.msra.mxu0 0.0
        %1011 = vmatprep.subr.mxu0 0.0
        %1012 = vmatpush1.msra.mxu0 0.0
        %1013 = vmatprep.subr.mxu0 0.0
        %1014 = vmatpush1.msra.mxu0 0.0
        %1015 = vmatprep.subr.mxu0 0.0
        %1016 = vmatpush1.msra.mxu0 0.0
        %1017 = vmatprep.subr.mxu0 0.0
        %1018 = vmatpush1.msra.mxu0 0.0
        %1019 = vmatprep.subr.mxu0 0.0
        %1020 = vmatpush1.msra.mxu0 0.0
        %1021 = vmatprep.subr.mxu0 0.0
        %1022 = vmatpush1.msra.mxu0 0.0
        %1023 = vmatprep.subr.mxu0 0.0
        %1024 = vmatpush1.msra.mxu0 0.0
        %1025 = vmatprep.subr.mxu0 0.0
        %1026 = vmatpush1.msra.mxu0 0.0
        %1027 = vmatprep.subr.mxu0 0.0
        %1028 = vmatpush1.msra.mxu0 0.0
        %1029 = vmatprep.subr.mxu0 0.0
        %1030 = vmatpush1.msra.mxu0 0.0
        %1031 = vmatprep.subr.mxu0 0.0
        %1032 = vmatpush1.msra.mxu0 0.0
        %1033 = vmatprep.subr.mxu0 0.0
        %1034 = vmatpush1.msra.mxu0 0.0
        %1035 = vmatprep.subr.mxu0 0.0
        %1036 = vmatpush1.msra.mxu0 0.0
        %1037 = vmatprep.mubr.f32.mxu0 0.0
        %1038 = vmatmul.mubr.f32.gmra.mrb[0].mxu0 %v895
        %v1039 = vpop.f32.mrb[0].mxu0
        %v1040 = vadd.f32 %v723, %v1039
        %v1041 = vpop.f32.mrb[0].mxu0
        %1042 = vdwg.mxu0
        %v1043 = vadd.f32 %v899, %v969
        %v1044 = vxor.u32 %v1043, 2147483648
        %v1045 = vmul.f32 %v1044, 1.442695
        %v1046 = vpow.pop %v1045
        %v1047 = vadd.f32 %v1046, 1.0
        %v1048 = vrcp.pop %v1047
        %v1049 = vmul.f32 1.0, %v1048
        %v1050 = vadd.f32 %v900, %v971
        %v1051 = vxor.u32 %v1050, 2147483648
        %v1052 = vmul.f32 %v1051, 1.442695
        %v1053 = vpow.pop %v1052
        %v1054 = vadd.f32 %v1053, 1.0
        %v1055 = vrcp.pop %v1054
        %v1056 = vmul.f32 1.0, %v1055
        %v1057 = vmul.f32 %v1049, %v1040
        %v1058 = vadd.f32 %v901, %v1057
        %v1059 = vtanh.pop %v1058
        %v1060 = vsub.f32 1.0, %v1056
        %v1061 = vmul.f32 %v1060, %v1059
        %v1062 = vmul.f32 %v1056, %v895
        %v1063 = vadd.f32 %v1061, %v1062
        %vm1064 = vcmp.gt.s32.totalorder %v654, 1
        %v1065 = vsel %vm1064, 1, 0
        %1066 = vset.pattern.permute.xlu0 0
        %1067 = vperm.xlu0 %1066, %v1065
        %v1068 = vpop.permute.xlu0 %1067
        %vm1069 = vcmp.eq.s32.totalorder %v1068, 1
        %v1070 = vsel %vm1069, %v1063, %v895
        %s1071 = smul.u32 2, 3
        %s1072 = smul.addr %s1071, 8
        %s1073 = scalar_lea.vmem [#allocation3], %s1072
        %v1074 = vld [vmem:[%s1073] sm:$0xff]
        %v1075 = vld [vmem:[%s1073 + $0x8] sm:$0xff]
        %v1076 = vld [vmem:[%s1073 + $0x10] sm:$0xff]
        %1077 = vmatprep.subr.mxu0 %v663
        %1078 = vmatpush1.msra.mxu0 %v662
        %1079 = vmatprep.subr.mxu0 %v666
        %1080 = vmatpush1.msra.mxu0 %v665
        %1081 = vmatprep.subr.mxu0 %v669
        %1082 = vmatpush1.msra.mxu0 %v668
        %1083 = vmatprep.subr.mxu0 %v672
        %1084 = vmatpush1.msra.mxu0 %v671
        %1085 = vmatprep.subr.mxu0 %v675
        %1086 = vmatpush1.msra.mxu0 %v674
        %1087 = vmatprep.subr.mxu0 %v678
        %1088 = vmatpush1.msra.mxu0 %v677
        %1089 = vmatprep.subr.mxu0 %v681
        %1090 = vmatpush1.msra.mxu0 %v680
        %1091 = vmatprep.subr.mxu0 %v684
        %1092 = vmatpush1.msra.mxu0 %v683
        %1093 = vmatprep.subr.mxu0 %v687
        %1094 = vmatpush1.msra.mxu0 %v686
        %1095 = vmatprep.subr.mxu0 %v690
        %1096 = vmatpush1.msra.mxu0 %v689
        %1097 = vmatprep.subr.mxu0 %v693
        %1098 = vmatpush1.msra.mxu0 %v692
        %1099 = vmatprep.subr.mxu0 %v696
        %1100 = vmatpush1.msra.mxu0 %v695
        %1101 = vmatprep.subr.mxu0 %v699
        %1102 = vmatpush1.msra.mxu0 %v698
        %1103 = vmatprep.subr.mxu0 %v702
        %1104 = vmatpush1.msra.mxu0 %v701
        %1105 = vmatprep.subr.mxu0 %v705
        %1106 = vmatpush1.msra.mxu0 %v704
        %1107 = vmatprep.subr.mxu0 %v708
        %1108 = vmatpush1.msra.mxu0 %v707
        %1109 = vmatprep.subr.mxu0 0.0
        %1110 = vmatpush1.msra.mxu0 0.0
        %1111 = vmatprep.subr.mxu0 0.0
        %1112 = vmatpush1.msra.mxu0 0.0
        %1113 = vmatprep.subr.mxu0 0.0
        %1114 = vmatpush1.msra.mxu0 0.0
        %1115 = vmatprep.subr.mxu0 0.0
        %1116 = vmatpush1.msra.mxu0 0.0
        %1117 = vmatprep.subr.mxu0 0.0
        %1118 = vmatpush1.msra.mxu0 0.0
        %1119 = vmatprep.subr.mxu0 0.0
        %1120 = vmatpush1.msra.mxu0 0.0
        %1121 = vmatprep.subr.mxu0 0.0
        %1122 = vmatpush1.msra.mxu0 0.0
        %1123 = vmatprep.subr.mxu0 0.0
        %1124 = vmatpush1.msra.mxu0 0.0
        %1125 = vmatprep.subr.mxu0 0.0
        %1126 = vmatpush1.msra.mxu0 0.0
        %1127 = vmatprep.subr.mxu0 0.0
        %1128 = vmatpush1.msra.mxu0 0.0
        %1129 = vmatprep.subr.mxu0 0.0
        %1130 = vmatpush1.msra.mxu0 0.0
        %1131 = vmatprep.subr.mxu0 0.0
        %1132 = vmatpush1.msra.mxu0 0.0
        %1133 = vmatprep.subr.mxu0 0.0
        %1134 = vmatpush1.msra.mxu0 0.0
        %1135 = vmatprep.subr.mxu0 0.0
        %1136 = vmatpush1.msra.mxu0 0.0
        %1137 = vmatprep.subr.mxu0 0.0
        %1138 = vmatpush1.msra.mxu0 0.0
        %1139 = vmatprep.subr.mxu0 0.0
        %1140 = vmatpush1.msra.mxu0 0.0
        %1141 = vmatprep.mubr.f32.mxu0 0.0
        %1142 = vmatmul.mubr.f32.gmra.mrb[0].mxu0 %v1070
        %v1143 = vpop.f32.mrb[0].mxu0
        %v1144 = vadd.f32 %v715, %v1143
        %v1145 = vpop.f32.mrb[0].mxu0
        %v1146 = vadd.f32 %v719, %v1145
        %1147 = vdwg.mxu0
        %1148 = vmatprep.subr.mxu0 0.0
        %1149 = vmatpush1.msra.mxu0 %v664
        %1150 = vmatprep.subr.mxu0 0.0
        %1151 = vmatpush1.msra.mxu0 %v667
        %1152 = vmatprep.subr.mxu0 0.0
        %1153 = vmatpush1.msra.mxu0 %v670
        %1154 = vmatprep.subr.mxu0 0.0
        %1155 = vmatpush1.msra.mxu0 %v673
        %1156 = vmatprep.subr.mxu0 0.0
        %1157 = vmatpush1.msra.mxu0 %v676
        %1158 = vmatprep.subr.mxu0 0.0
        %1159 = vmatpush1.msra.mxu0 %v679
        %1160 = vmatprep.subr.mxu0 0.0
        %1161 = vmatpush1.msra.mxu0 %v682
        %1162 = vmatprep.subr.mxu0 0.0
        %1163 = vmatpush1.msra.mxu0 %v685
        %1164 = vmatprep.subr.mxu0 0.0
        %1165 = vmatpush1.msra.mxu0 %v688
        %1166 = vmatprep.subr.mxu0 0.0
        %1167 = vmatpush1.msra.mxu0 %v691
        %1168 = vmatprep.subr.mxu0 0.0
        %1169 = vmatpush1.msra.mxu0 %v694
        %1170 = vmatprep.subr.mxu0 0.0
        %1171 = vmatpush1.msra.mxu0 %v697
        %1172 = vmatprep.subr.mxu0 0.0
        %1173 = vmatpush1.msra.mxu0 %v700
        %1174 = vmatprep.subr.mxu0 0.0
        %1175 = vmatpush1.msra.mxu0 %v703
        %1176 = vmatprep.subr.mxu0 0.0
        %1177 = vmatpush1.msra.mxu0 %v706
        %1178 = vmatprep.subr.mxu0 0.0
        %1179 = vmatpush1.msra.mxu0 %v709
        %1180 = vmatprep.subr.mxu0 0.0
        %1181 = vmatpush1.msra.mxu0 0.0
        %1182 = vmatprep.subr.mxu0 0.0
        %1183 = vmatpush1.msra.mxu0 0.0
        %1184 = vmatprep.subr.mxu0 0.0
        %1185 = vmatpush1.msra.mxu0 0.0
        %1186 = vmatprep.subr.mxu0 0.0
        %1187 = vmatpush1.msra.mxu0 0.0
        %1188 = vmatprep.subr.mxu0 0.0
        %1189 = vmatpush1.msra.mxu0 0.0
        %1190 = vmatprep.subr.mxu0 0.0
        %1191 = vmatpush1.msra.mxu0 0.0
        %1192 = vmatprep.subr.mxu0 0.0
        %1193 = vmatpush1.msra.mxu0 0.0
        %1194 = vmatprep.subr.mxu0 0.0
        %1195 = vmatpush1.msra.mxu0 0.0
        %1196 = vmatprep.subr.mxu0 0.0
        %1197 = vmatpush1.msra.mxu0 0.0
        %1198 = vmatprep.subr.mxu0 0.0
        %1199 = vmatpush1.msra.mxu0 0.0
        %1200 = vmatprep.subr.mxu0 0.0
        %1201 = vmatpush1.msra.mxu0 0.0
        %1202 = vmatprep.subr.mxu0 0.0
        %1203 = vmatpush1.msra.mxu0 0.0
        %1204 = vmatprep.subr.mxu0 0.0
        %1205 = vmatpush1.msra.mxu0 0.0
        %1206 = vmatprep.subr.mxu0 0.0
        %1207 = vmatpush1.msra.mxu0 0.0
        %1208 = vmatprep.subr.mxu0 0.0
        %1209 = vmatpush1.msra.mxu0 0.0
        %1210 = vmatprep.subr.mxu0 0.0
        %1211 = vmatpush1.msra.mxu0 0.0
        %1212 = vmatprep.mubr.f32.mxu0 0.0
        %1213 = vmatmul.mubr.f32.gmra.mrb[0].mxu0 %v1070
        %v1214 = vpop.f32.mrb[0].mxu0
        %v1215 = vadd.f32 %v723, %v1214
        %v1216 = vpop.f32.mrb[0].mxu0
        %1217 = vdwg.mxu0
        %v1218 = vadd.f32 %v1074, %v1144
        %v1219 = vxor.u32 %v1218, 2147483648
        %v1220 = vmul.f32 %v1219, 1.442695
        %v1221 = vpow.pop %v1220
        %v1222 = vadd.f32 %v1221, 1.0
        %v1223 = vrcp.pop %v1222
        %v1224 = vmul.f32 1.0, %v1223
        %v1225 = vadd.f32 %v1075, %v1146
        %v1226 = vxor.u32 %v1225, 2147483648
        %v1227 = vmul.f32 %v1226, 1.442695
        %v1228 = vpow.pop %v1227
        %v1229 = vadd.f32 %v1228, 1.0
        %v1230 = vrcp.pop %v1229
        %v1231 = vmul.f32 1.0, %v1230
        %v1232 = vmul.f32 %v1224, %v1215
        %v1233 = vadd.f32 %v1076, %v1232
        %v1234 = vtanh.pop %v1233
        %v1235 = vsub.f32 1.0, %v1231
        %v1236 = vmul.f32 %v1235, %v1234
        %v1237 = vmul.f32 %v1231, %v1070
        %v1238 = vadd.f32 %v1236, %v1237
        %vm1239 = vcmp.gt.s32.totalorder %v654, 2
        %v1240 = vsel %vm1239, 1, 0
        %1241 = vset.pattern.permute.xlu0 0
        %1242 = vperm.xlu0 %1241, %v1240
        %v1243 = vpop.permute.xlu0 %1242
        %vm1244 = vcmp.eq.s32.totalorder %v1243, 1
        %v1245 = vsel %vm1244, %v1238, %v1070
        %s1246 = smul.u32 3, 3
        %s1247 = smul.addr %s1246, 8
        %s1248 = scalar_lea.vmem [#allocation3], %s1247
        %v1249 = vld [vmem:[%s1248] sm:$0xff]
        %v1250 = vld [vmem:[%s1248 + $0x8] sm:$0xff]
        %v1251 = vld [vmem:[%s1248 + $0x10] sm:$0xff]
        %1252 = vmatprep.subr.mxu0 %v663
        %1253 = vmatpush1.msra.mxu0 %v662
        %1254 = vmatprep.subr.mxu0 %v666
        %1255 = vmatpush1.msra.mxu0 %v665
        %1256 = vmatprep.subr.mxu0 %v669
        %1257 = vmatpush1.msra.mxu0 %v668
        %1258 = vmatprep.subr.mxu0 %v672
        %1259 = vmatpush1.msra.mxu0 %v671
        %1260 = vmatprep.subr.mxu0 %v675
        %1261 = vmatpush1.msra.mxu0 %v674
        %1262 = vmatprep.subr.mxu0 %v678
        %1263 = vmatpush1.msra.mxu0 %v677
        %1264 = vmatprep.subr.mxu0 %v681
        %1265 = vmatpush1.msra.mxu0 %v680
        %1266 = vmatprep.subr.mxu0 %v684
        %1267 = vmatpush1.msra.mxu0 %v683
        %1268 = vmatprep.subr.mxu0 %v687
        %1269 = vmatpush1.msra.mxu0 %v686
        %1270 = vmatprep.subr.mxu0 %v690
        %1271 = vmatpush1.msra.mxu0 %v689
        %1272 = vmatprep.subr.mxu0 %v693
        %1273 = vmatpush1.msra.mxu0 %v692
        %1274 = vmatprep.subr.mxu0 %v696
        %1275 = vmatpush1.msra.mxu0 %v695
        %1276 = vmatprep.subr.mxu0 %v699
        %1277 = vmatpush1.msra.mxu0 %v698
        %1278 = vmatprep.subr.mxu0 %v702
        %1279 = vmatpush1.msra.mxu0 %v701
        %1280 = vmatprep.subr.mxu0 %v705
        %1281 = vmatpush1.msra.mxu0 %v704
        %1282 = vmatprep.subr.mxu0 %v708
        %1283 = vmatpush1.msra.mxu0 %v707
        %1284 = vmatprep.subr.mxu0 0.0
        %1285 = vmatpush1.msra.mxu0 0.0
        %1286 = vmatprep.subr.mxu0 0.0
        %1287 = vmatpush1.msra.mxu0 0.0
        %1288 = vmatprep.subr.mxu0 0.0
        %1289 = vmatpush1.msra.mxu0 0.0
        %1290 = vmatprep.subr.mxu0 0.0
        %1291 = vmatpush1.msra.mxu0 0.0
        %1292 = vmatprep.subr.mxu0 0.0
        %1293 = vmatpush1.msra.mxu0 0.0
        %1294 = vmatprep.subr.mxu0 0.0
        %1295 = vmatpush1.msra.mxu0 0.0
        %1296 = vmatprep.subr.mxu0 0.0
        %1297 = vmatpush1.msra.mxu0 0.0
        %1298 = vmatprep.subr.mxu0 0.0
        %1299 = vmatpush1.msra.mxu0 0.0
        %1300 = vmatprep.subr.mxu0 0.0
        %1301 = vmatpush1.msra.mxu0 0.0
        %1302 = vmatprep.subr.mxu0 0.0
        %1303 = vmatpush1.msra.mxu0 0.0
        %1304 = vmatprep.subr.mxu0 0.0
        %1305 = vmatpush1.msra.mxu0 0.0
        %1306 = vmatprep.subr.mxu0 0.0
        %1307 = vmatpush1.msra.mxu0 0.0
        %1308 = vmatprep.subr.mxu0 0.0
        %1309 = vmatpush1.msra.mxu0 0.0
        %1310 = vmatprep.subr.mxu0 0.0
        %1311 = vmatpush1.msra.mxu0 0.0
        %1312 = vmatprep.subr.mxu0 0.0
        %1313 = vmatpush1.msra.mxu0 0.0
        %1314 = vmatprep.subr.mxu0 0.0
        %1315 = vmatpush1.msra.mxu0 0.0
        %1316 = vmatprep.mubr.f32.mxu0 0.0
        %1317 = vmatmul.mubr.f32.gmra.mrb[0].mxu0 %v1245
        %v1318 = vpop.f32.mrb[0].mxu0
        %v1319 = vadd.f32 %v715, %v1318
        %v1320 = vpop.f32.mrb[0].mxu0
        %v1321 = vadd.f32 %v719, %v1320
        %1322 = vdwg.mxu0
        %1323 = vmatprep.subr.mxu0 0.0
        %1324 = vmatpush1.msra.mxu0 %v664
        %1325 = vmatprep.subr.mxu0 0.0
        %1326 = vmatpush1.msra.mxu0 %v667
        %1327 = vmatprep.subr.mxu0 0.0
        %1328 = vmatpush1.msra.mxu0 %v670
        %1329 = vmatprep.subr.mxu0 0.0
        %1330 = vmatpush1.msra.mxu0 %v673
        %1331 = vmatprep.subr.mxu0 0.0
        %1332 = vmatpush1.msra.mxu0 %v676
        %1333 = vmatprep.subr.mxu0 0.0
        %1334 = vmatpush1.msra.mxu0 %v679
        %1335 = vmatprep.subr.mxu0 0.0
        %1336 = vmatpush1.msra.mxu0 %v682
        %1337 = vmatprep.subr.mxu0 0.0
        %1338 = vmatpush1.msra.mxu0 %v685
        %1339 = vmatprep.subr.mxu0 0.0
        %1340 = vmatpush1.msra.mxu0 %v688
        %1341 = vmatprep.subr.mxu0 0.0
        %1342 = vmatpush1.msra.mxu0 %v691
        %1343 = vmatprep.subr.mxu0 0.0
        %1344 = vmatpush1.msra.mxu0 %v694
        %1345 = vmatprep.subr.mxu0 0.0
        %1346 = vmatpush1.msra.mxu0 %v697
        %1347 = vmatprep.subr.mxu0 0.0
        %1348 = vmatpush1.msra.mxu0 %v700
        %1349 = vmatprep.subr.mxu0 0.0
        %1350 = vmatpush1.msra.mxu0 %v703
        %1351 = vmatprep.subr.mxu0 0.0
        %1352 = vmatpush1.msra.mxu0 %v706
        %1353 = vmatprep.subr.mxu0 0.0
        %1354 = vmatpush1.msra.mxu0 %v709
        %1355 = vmatprep.subr.mxu0 0.0
        %1356 = vmatpush1.msra.mxu0 0.0
        %1357 = vmatprep.subr.mxu0 0.0
        %1358 = vmatpush1.msra.mxu0 0.0
        %1359 = vmatprep.subr.mxu0 0.0
        %1360 = vmatpush1.msra.mxu0 0.0
        %1361 = vmatprep.subr.mxu0 0.0
        %1362 = vmatpush1.msra.mxu0 0.0
        %1363 = vmatprep.subr.mxu0 0.0
        %1364 = vmatpush1.msra.mxu0 0.0
        %1365 = vmatprep.subr.mxu0 0.0
        %1366 = vmatpush1.msra.mxu0 0.0
        %1367 = vmatprep.subr.mxu0 0.0
        %1368 = vmatpush1.msra.mxu0 0.0
        %1369 = vmatprep.subr.mxu0 0.0
        %1370 = vmatpush1.msra.mxu0 0.0
        %1371 = vmatprep.subr.mxu0 0.0
        %1372 = vmatpush1.msra.mxu0 0.0
        %1373 = vmatprep.subr.mxu0 0.0
        %1374 = vmatpush1.msra.mxu0 0.0
        %1375 = vmatprep.subr.mxu0 0.0
        %1376 = vmatpush1.msra.mxu0 0.0
        %1377 = vmatprep.subr.mxu0 0.0
        %1378 = vmatpush1.msra.mxu0 0.0
        %1379 = vmatprep.subr.mxu0 0.0
        %1380 = vmatpush1.msra.mxu0 0.0
        %1381 = vmatprep.subr.mxu0 0.0
        %1382 = vmatpush1.msra.mxu0 0.0
        %1383 = vmatprep.subr.mxu0 0.0
        %1384 = vmatpush1.msra.mxu0 0.0
        %1385 = vmatprep.subr.mxu0 0.0
        %1386 = vmatpush1.msra.mxu0 0.0
        %1387 = vmatprep.mubr.f32.mxu0 0.0
        %1388 = vmatmul.mubr.f32.gmra.mrb[0].mxu0 %v1245
        %v1389 = vpop.f32.mrb[0].mxu0
        %v1390 = vadd.f32 %v723, %v1389
        %v1391 = vpop.f32.mrb[0].mxu0
        %1392 = vdwg.mxu0
        %v1393 = vadd.f32 %v1249, %v1319
        %v1394 = vxor.u32 %v1393, 2147483648
        %v1395 = vmul.f32 %v1394, 1.442695
        %v1396 = vpow.pop %v1395
        %v1397 = vadd.f32 %v1396, 1.0
        %v1398 = vrcp.pop %v1397
        %v1399 = vmul.f32 1.0, %v1398
        %v1400 = vadd.f32 %v1250, %v1321
        %v1401 = vxor.u32 %v1400, 2147483648
        %v1402 = vmul.f32 %v1401, 1.442695
        %v1403 = vpow.pop %v1402
        %v1404 = vadd.f32 %v1403, 1.0
        %v1405 = vrcp.pop %v1404
        %v1406 = vmul.f32 1.0, %v1405
        %v1407 = vmul.f32 %v1399, %v1390
        %v1408 = vadd.f32 %v1251, %v1407
        %v1409 = vtanh.pop %v1408
        %v1410 = vsub.f32 1.0, %v1406
        %v1411 = vmul.f32 %v1410, %v1409
        %v1412 = vmul.f32 %v1406, %v1245
        %v1413 = vadd.f32 %v1411, %v1412
        %vm1414 = vcmp.gt.s32.totalorder %v654, 3
        %v1415 = vsel %vm1414, 1, 0
        %1416 = vset.pattern.permute.xlu0 0
        %1417 = vperm.xlu0 %1416, %v1415
        %v1418 = vpop.permute.xlu0 %1417
        %vm1419 = vcmp.eq.s32.totalorder %v1418, 1
        %v1420 = vsel %vm1419, %v1413, %v1245
        %1421 = vst [vmem:[#allocation2] sm:$0xff] %v1420
        %p1422 = scmp.eq.s32.totalorder %s27, 1
        // Predicated region
        $region85: #{tpu_custom_call.1} parent=59 // pred_check
          %p1423 = pneg %p1422
        $region86: #{tpu_custom_call.1} parent=59 // pred_check_branch
          %1425 = sbr.rel (%p1423) target = $region88
        $region87: #{tpu_custom_call.1} parent=59 // pred_region
          %v1426 = vld [vmem:[#allocation2] sm:$0xff]
          %v1427 = vmax.f32 %v1426, 0.0
          %v1428 = vld [vmem:[#allocation10] sm:$0xff]
          %v1429 = vld [vmem:[#allocation10 + $0x8] sm:$0xff]
          %v1430 = vld [vmem:[#allocation10 + $0x10] sm:$0xff]
          %v1431 = vld [vmem:[#allocation10 + $0x18] sm:$0xff]
          %v1432 = vld [vmem:[#allocation10 + $0x20] sm:$0xff]
          %v1433 = vld [vmem:[#allocation10 + $0x28] sm:$0xff]
          %v1434 = vld [vmem:[#allocation10 + $0x30] sm:$0xff]
          %v1435 = vld [vmem:[#allocation10 + $0x38] sm:$0xff]
          %v1436 = vld [vmem:[#allocation10 + $0x40] sm:$0xff]
          %v1437 = vld [vmem:[#allocation10 + $0x48] sm:$0xff]
          %v1438 = vld [vmem:[#allocation10 + $0x50] sm:$0xff]
          %v1439 = vld [vmem:[#allocation10 + $0x58] sm:$0xff]
          %v1440 = vld [vmem:[#allocation10 + $0x60] sm:$0xff]
          %v1441 = vld [vmem:[#allocation10 + $0x68] sm:$0xff]
          %v1442 = vld [vmem:[#allocation10 + $0x70] sm:$0xff]
          %v1443 = vld [vmem:[#allocation10 + $0x78] sm:$0xff]
          %v1444 = vld [vmem:[%s7] sm:$0x1]
          %v1446 = vlaneseq
          %v1447 = vshrl.u32 %v1446, 7
          %v1448 = vsub.s32 0, %v1447
          %v1449 = vrot.slane %v1444, %v1448
          %1451 = vmatprep.subr.mxu0 0.0
          %1452 = vmatpush1.msra.mxu0 %v1428
          %1453 = vmatprep.subr.mxu0 0.0
          %1454 = vmatpush1.msra.mxu0 %v1429
          %1455 = vmatprep.subr.mxu0 0.0
          %1456 = vmatpush1.msra.mxu0 %v1430
          %1457 = vmatprep.subr.mxu0 0.0
          %1458 = vmatpush1.msra.mxu0 %v1431
          %1459 = vmatprep.subr.mxu0 0.0
          %1460 = vmatpush1.msra.mxu0 %v1432
          %1461 = vmatprep.subr.mxu0 0.0
          %1462 = vmatpush1.msra.mxu0 %v1433
          %1463 = vmatprep.subr.mxu0 0.0
          %1464 = vmatpush1.msra.mxu0 %v1434
          %1465 = vmatprep.subr.mxu0 0.0
          %1466 = vmatpush1.msra.mxu0 %v1435
          %1467 = vmatprep.subr.mxu0 0.0
          %1468 = vmatpush1.msra.mxu0 %v1436
          %1469 = vmatprep.subr.mxu0 0.0
          %1470 = vmatpush1.msra.mxu0 %v1437
          %1471 = vmatprep.subr.mxu0 0.0
          %1472 = vmatpush1.msra.mxu0 %v1438
          %1473 = vmatprep.subr.mxu0 0.0
          %1474 = vmatpush1.msra.mxu0 %v1439
          %1475 = vmatprep.subr.mxu0 0.0
          %1476 = vmatpush1.msra.mxu0 %v1440
          %1477 = vmatprep.subr.mxu0 0.0
          %1478 = vmatpush1.msra.mxu0 %v1441
          %1479 = vmatprep.subr.mxu0 0.0
          %1480 = vmatpush1.msra.mxu0 %v1442
          %1481 = vmatprep.subr.mxu0 0.0
          %1482 = vmatpush1.msra.mxu0 %v1443
          %1483 = vmatprep.subr.mxu0 0.0
          %1484 = vmatpush1.msra.mxu0 0.0
          %1485 = vmatprep.subr.mxu0 0.0
          %1486 = vmatpush1.msra.mxu0 0.0
          %1487 = vmatprep.subr.mxu0 0.0
          %1488 = vmatpush1.msra.mxu0 0.0
          %1489 = vmatprep.subr.mxu0 0.0
          %1490 = vmatpush1.msra.mxu0 0.0
          %1491 = vmatprep.subr.mxu0 0.0
          %1492 = vmatpush1.msra.mxu0 0.0
          %1493 = vmatprep.subr.mxu0 0.0
          %1494 = vmatpush1.msra.mxu0 0.0
          %1495 = vmatprep.subr.mxu0 0.0
          %1496 = vmatpush1.msra.mxu0 0.0
          %1497 = vmatprep.subr.mxu0 0.0
          %1498 = vmatpush1.msra.mxu0 0.0
          %1499 = vmatprep.subr.mxu0 0.0
          %1500 = vmatpush1.msra.mxu0 0.0
          %1501 = vmatprep.subr.mxu0 0.0
          %1502 = vmatpush1.msra.mxu0 0.0
          %1503 = vmatprep.subr.mxu0 0.0
          %1504 = vmatpush1.msra.mxu0 0.0
          %1505 = vmatprep.subr.mxu0 0.0
          %1506 = vmatpush1.msra.mxu0 0.0
          %1507 = vmatprep.subr.mxu0 0.0
          %1508 = vmatpush1.msra.mxu0 0.0
          %1509 = vmatprep.subr.mxu0 0.0
          %1510 = vmatpush1.msra.mxu0 0.0
          %1511 = vmatprep.subr.mxu0 0.0
          %1512 = vmatpush1.msra.mxu0 0.0
          %1513 = vmatprep.subr.mxu0 0.0
          %1514 = vmatpush1.msra.mxu0 0.0
          %1515 = vmatprep.mubr.f32.mxu0 0.0
          %1516 = vmatmul.mubr.f32.gmra.mrb[0].mxu0 %v1427
          %v1517 = vpop.f32.mrb[0].mxu0
          %v1518 = vadd.f32 %v1449, %v1517
          %v1519 = vpop.f32.mrb[0].mxu0
          %1520 = vdwg.mxu0
          %v1521 = vmax.f32 %v1518, 0.0
          %v1522 = vld [vmem:[#allocation12] sm:$0xff]
          %v1523 = vld [vmem:[#allocation12 + $0x8] sm:$0xff]
          %v1524 = vld [vmem:[#allocation12 + $0x10] sm:$0xff]
          %v1525 = vld [vmem:[#allocation12 + $0x18] sm:$0xff]
          %v1526 = vld [vmem:[#allocation12 + $0x20] sm:$0xff]
          %v1527 = vld [vmem:[#allocation12 + $0x28] sm:$0xff]
          %v1528 = vld [vmem:[#allocation12 + $0x30] sm:$0xff]
          %v1529 = vld [vmem:[#allocation12 + $0x38] sm:$0xff]
          %v1530 = vld [vmem:[#allocation12 + $0x40] sm:$0xff]
          %v1531 = vld [vmem:[#allocation12 + $0x48] sm:$0xff]
          %v1532 = vld [vmem:[#allocation12 + $0x50] sm:$0xff]
          %v1533 = vld [vmem:[#allocation12 + $0x58] sm:$0xff]
          %v1534 = vld [vmem:[#allocation12 + $0x60] sm:$0xff]
          %v1535 = vld [vmem:[#allocation12 + $0x68] sm:$0xff]
          %v1536 = vld [vmem:[#allocation12 + $0x70] sm:$0xff]
          %v1537 = vld [vmem:[#allocation12 + $0x78] sm:$0xff]
          %v1538 = vld [vmem:[%s9] sm:$0x1]
          %v1540 = vlaneseq
          %v1541 = vshrl.u32 %v1540, 7
          %v1542 = vsub.s32 0, %v1541
          %v1543 = vrot.slane %v1538, %v1542
          %1545 = vmatprep.subr.mxu0 0.0
          %1546 = vmatpush1.msra.mxu0 %v1522
          %1547 = vmatprep.subr.mxu0 0.0
          %1548 = vmatpush1.msra.mxu0 %v1523
          %1549 = vmatprep.subr.mxu0 0.0
          %1550 = vmatpush1.msra.mxu0 %v1524
          %1551 = vmatprep.subr.mxu0 0.0
          %1552 = vmatpush1.msra.mxu0 %v1525
          %1553 = vmatprep.subr.mxu0 0.0
          %1554 = vmatpush1.msra.mxu0 %v1526
          %1555 = vmatprep.subr.mxu0 0.0
          %1556 = vmatpush1.msra.mxu0 %v1527
          %1557 = vmatprep.subr.mxu0 0.0
          %1558 = vmatpush1.msra.mxu0 %v1528
          %1559 = vmatprep.subr.mxu0 0.0
          %1560 = vmatpush1.msra.mxu0 %v1529
          %1561 = vmatprep.subr.mxu0 0.0
          %1562 = vmatpush1.msra.mxu0 %v1530
          %1563 = vmatprep.subr.mxu0 0.0
          %1564 = vmatpush1.msra.mxu0 %v1531
          %1565 = vmatprep.subr.mxu0 0.0
          %1566 = vmatpush1.msra.mxu0 %v1532
          %1567 = vmatprep.subr.mxu0 0.0
          %1568 = vmatpush1.msra.mxu0 %v1533
          %1569 = vmatprep.subr.mxu0 0.0
          %1570 = vmatpush1.msra.mxu0 %v1534
          %1571 = vmatprep.subr.mxu0 0.0
          %1572 = vmatpush1.msra.mxu0 %v1535
          %1573 = vmatprep.subr.mxu0 0.0
          %1574 = vmatpush1.msra.mxu0 %v1536
          %1575 = vmatprep.subr.mxu0 0.0
          %1576 = vmatpush1.msra.mxu0 %v1537
          %1577 = vmatprep.subr.mxu0 0.0
          %1578 = vmatpush1.msra.mxu0 0.0
          %1579 = vmatprep.subr.mxu0 0.0
          %1580 = vmatpush1.msra.mxu0 0.0
          %1581 = vmatprep.subr.mxu0 0.0
          %1582 = vmatpush1.msra.mxu0 0.0
          %1583 = vmatprep.subr.mxu0 0.0
          %1584 = vmatpush1.msra.mxu0 0.0
          %1585 = vmatprep.subr.mxu0 0.0
          %1586 = vmatpush1.msra.mxu0 0.0
          %1587 = vmatprep.subr.mxu0 0.0
          %1588 = vmatpush1.msra.mxu0 0.0
          %1589 = vmatprep.subr.mxu0 0.0
          %1590 = vmatpush1.msra.mxu0 0.0
          %1591 = vmatprep.subr.mxu0 0.0
          %1592 = vmatpush1.msra.mxu0 0.0
          %1593 = vmatprep.subr.mxu0 0.0
          %1594 = vmatpush1.msra.mxu0 0.0
          %1595 = vmatprep.subr.mxu0 0.0
          %1596 = vmatpush1.msra.mxu0 0.0
          %1597 = vmatprep.subr.mxu0 0.0
          %1598 = vmatpush1.msra.mxu0 0.0
          %1599 = vmatprep.subr.mxu0 0.0
          %1600 = vmatpush1.msra.mxu0 0.0
          %1601 = vmatprep.subr.mxu0 0.0
          %1602 = vmatpush1.msra.mxu0 0.0
          %1603 = vmatprep.subr.mxu0 0.0
          %1604 = vmatpush1.msra.mxu0 0.0
          %1605 = vmatprep.subr.mxu0 0.0
          %1606 = vmatpush1.msra.mxu0 0.0
          %1607 = vmatprep.subr.mxu0 0.0
          %1608 = vmatpush1.msra.mxu0 0.0
          %1609 = vmatprep.mubr.f32.mxu0 0.0
          %1610 = vmatmul.mubr.f32.gmra.mrb[0].mxu0 %v1521
          %v1611 = vpop.f32.mrb[0].mxu0
          %v1612 = vadd.f32 %v1543, %v1611
          %v1613 = vpop.f32.mrb[0].mxu0
          %1614 = vdwg.mxu0
          %1615 = vst [vmem:[#allocation13] sm:$0xff] %v1612
        $region88: #{tpu_custom_call.1} parent=59 // pred_fallthru
          _
        // Predicated region
        $region89: #{tpu_custom_call.1} parent=59 // pred_check
          %p1616 = pneg %p255
        $region90: #{tpu_custom_call.1} parent=59 // pred_check_branch
          %1618 = sbr.rel (%p1616) target = $region92
        $region91: #{tpu_custom_call.1} parent=59 // pred_region
          %s1620 = ssub.s32 128, 128
          %1621 = vsyncadd [#allocation6], %s1620
          %s1623 = sshll.u32 [#allocation13], 4
          %s1624 = int_to_ptr.vmem [resolvable:$true] %s1623
          %1626 = dma.vmem_to_hbm [thread:$0]  %s1624, 128, %s10, [#allocation6]
        $region92: #{tpu_custom_call.1} parent=59 // pred_fallthru
          _
        // Predicated region
        $region93: #{tpu_custom_call.1} parent=59 // pred_check
          %p1627 = pneg %p255
        $region94: #{tpu_custom_call.1} parent=59 // pred_check_branch
          %1629 = sbr.rel (%p1627) target = $region96
        $region95: #{tpu_custom_call.1} parent=59 // pred_region
          %1630 = dma.done [#allocation6], 128
        $region96: #{tpu_custom_call.1} parent=59 // pred_fallthru
          _
      $region60: #{tpu_custom_call.1} parent=5 // pred_fallthru
        _
      %p1631 = scmp.le.s32.totalorder 2, %s22
      // Predicated region
      $region97: #{tpu_custom_call.1} parent=5 // pred_check
        %p1632 = pneg %p1631
      $region98: #{tpu_custom_call.1} parent=5 // pred_check_branch
        %1634 = sbr.rel (%p1632) target = $region100
      $region99: #{tpu_custom_call.1} parent=5 // pred_region
        %s1635 = ssub.s32 %s22, 2
      $region100: #{tpu_custom_call.1} parent=5 // pred_fallthru
        _
    $region6: #{tpu_custom_call.1} parent=1 // loop_footer
      %s26 = sadd.s32 1, %s22
    $region7: #{tpu_custom_call.1} parent=1 // loop_footer_branch
      %21 = sbr.rel target = $region3
    $region8: #{tpu_custom_call.1} parent=1 // loop_exit
      _
    %1636 = vsyncpa [#allocation5], 1
    %s1637 = scalar_lea.sflag [#allocation5], 1
    %1638 = vsyncpa %s1637, 1
    %1639 = vsyncpa [#allocation8], 1
    %1640 = vsyncpa [#allocation11], 1
    %1641 = vsyncpa [#allocation6], 1
    %s1642 = scalar_lea.sflag [#allocation6], 1
    %1643 = vsyncpa %s1642, 1

</llo_original>
